<compile_context>
chip_gen: v6e
topology: v6e:2x2x1
jax: 0.10.0
libtpu: 0.0.40
codegen_flags: <defaults>
</compile_context>

<pallas_src>
import jax
import jax.numpy as jnp
from jax.experimental import pallas as pl
from jax.experimental.pallas import tpu as pltpu


# ----------------------------- Pallas kernel ------------------------------- #

def _fused_head_softmax_kernel(text_ref, fea_ref,
                               wt_ref, bt_ref, wf_ref, bf_ref,
                               wp_ref, bp_ref, gamma_ref, beta_ref,
                               wlt_ref, wlf_ref, bl_ref,
                               logits_ref, probs_ref, preds_ref):
    num_choices, tb, _ = text_ref.shape

    gamma = gamma_ref[...]
    beta = beta_ref[...]

    def layernorm(x):  # biased variance, eps = 1e-5 (PyTorch nn.LayerNorm default)
        mu = jnp.mean(x, axis=-1, keepdims=True)
        var = jnp.mean((x - mu) ** 2, axis=-1, keepdims=True)
        return (x - mu) * jax.lax.rsqrt(var + 1e-5) * gamma + beta

    lane = jax.lax.broadcasted_iota(jnp.int32, (tb, num_choices), dimension=1)
    logits = jnp.zeros((tb, num_choices), jnp.float32)

    # Static unroll over choices: each choice is a contiguous (tb, D) slab, so the
    # poolers / projection run as plain 2-D MXU matmuls, and Linear(2*Df, 1) becomes
    # a VPU multiply + XLU lane-reduce.  The per-choice scalar logit is placed into
    # lane c of the (tb, C) logits tile with an iota mask (no in-kernel reshape).
    for c in range(num_choices):
        t = jnp.tanh(jnp.dot(text_ref[c], wt_ref[...],
                             preferred_element_type=jnp.float32) + bt_ref[...])
        f = jnp.tanh(jnp.dot(fea_ref[c], wf_ref[...],
                             preferred_element_type=jnp.float32) + bf_ref[...])
        t = jnp.dot(t, wp_ref[...], preferred_element_type=jnp.float32) + bp_ref[...]
        t = layernorm(t)
        f = layernorm(f)
        # [t, f] @ Wl == t @ Wl[:Df] + f @ Wl[Df:]  (concat folded into split reduces)
        col = (jnp.sum(t * wlt_ref[...], axis=-1, keepdims=True)
               + jnp.sum(f * wlf_ref[...], axis=-1, keepdims=True)
               + bl_ref[...])                                   # (tb, 1)
        logits = logits + jnp.where(lane == c, col, 0.0)

    logits_ref[...] = logits

    # Softmax over choices (numerically stable).
    m = jnp.max(logits, axis=-1, keepdims=True)
    e = jnp.exp(logits - m)
    s = jnp.sum(e, axis=-1, keepdims=True)
    inv = pl.reciprocal(s, approx=True)
    inv = inv * (2.0 - s * inv)          # one Newton step -> near-exact, still EUP path
    probs_ref[...] = e * inv

    # argmax with first-occurrence tie-break (matches torch.argmax).
    is_max = logits == m
    preds_ref[...] = jnp.min(jnp.where(is_max, lane, num_choices),
                             axis=-1, keepdims=True)


# ------------------------------ Pallas wrapper ------------------------------ #

def _pick_block_b(b, max_rows=256):
    """Rows-per-choice per grid step.  256 keeps 2 x block x C x (Dt+Df) x 4B well
    inside v7x's 32 MiB scoped-VMEM default even at BERT-scale hidden sizes."""
    if b <= max_rows:
        return b
    start = max_rows - (max_rows % 8)
    for t in range(start, 0, -8):        # prefer sublane-aligned divisors
        if b % t == 0:
            return t
    return b


def fused_head_call(text_cbd, fea_cbd, p, block_b=None):
    num_choices, b, dt = text_cbd.shape
    df = fea_cbd.shape[-1]
    if block_b is None:
        block_b = _pick_block_b(b)
    grid = (b // block_b,)

    def act_spec(d):
        return pl.BlockSpec((num_choices, block_b, d), lambda i: (0, i, 0))

    def w_spec(arr):  # same block every step -> weights stay VMEM-resident
        return pl.BlockSpec(arr.shape, lambda i: (0, 0))

    weights = (p["wt_pool"], p["bt_pool"], p["wf_pool"], p["bf_pool"],
               p["w_proj"], p["b_proj"], p["ln_gamma"], p["ln_beta"],
               p["w_logit_t"], p["w_logit_f"], p["b_logit"])

    in_specs = [act_spec(dt), act_spec(df)] + [w_spec(w) for w in weights]

    out_shape = (jax.ShapeDtypeStruct((b, num_choices), jnp.float32),   # logits
                 jax.ShapeDtypeStruct((b, num_choices), jnp.float32),   # probs
                 jax.ShapeDtypeStruct((b, 1), jnp.int32))               # preds
    out_specs = (pl.BlockSpec((block_b, num_choices), lambda i: (i, 0)),
                 pl.BlockSpec((block_b, num_choices), lambda i: (i, 0)),
                 pl.BlockSpec((block_b, 1), lambda i: (i, 0)))

    return pl.pallas_call(
        _fused_head_softmax_kernel,
        grid=grid,
        in_specs=in_specs,
        out_specs=out_specs,
        out_shape=out_shape,
        compiler_params=pltpu.CompilerParams(
            dimension_semantics=("parallel",)),   # sharded across v7x's 2 TCs
    )(text_cbd, fea_cbd, *weights)


# ------------------------------ Model glue ---------------------------------- #

def init_params(key, vocab, text_dim, fea_dim):
    """Deterministic init mirroring FeatureModel._init_weights:
    Linear/Embedding weights ~ N(0, 0.02), biases = 0, LayerNorm gamma=1/beta=0."""
    keys = jax.random.split(key, 6)
    std = 0.02
    p = {
        "emb_table": jax.random.normal(keys[0], (vocab, text_dim)) * std,
        "wt_pool":   jax.random.normal(keys[1], (text_dim, text_dim)) * std,
        "bt_pool":   jnp.zeros((1, text_dim)),
        "wf_pool":   jax.random.normal(keys[2], (fea_dim, fea_dim)) * std,
        "bf_pool":   jnp.zeros((1, fea_dim)),
        "w_proj":    jax.random.normal(keys[3], (text_dim, fea_dim)) * std,   # t2f
        "b_proj":    jnp.zeros((1, fea_dim)),
        "ln_gamma":  jnp.ones((1, fea_dim)),
        "ln_beta":   jnp.zeros((1, fea_dim)),
        "w_logit_t": jax.random.normal(keys[4], (1, fea_dim)) * std,  # Wl[:, :Df] row
        "w_logit_f": jax.random.normal(keys[5], (1, fea_dim)) * std,  # Wl[:, Df:] row
        "b_logit":   jnp.zeros((1, 1)),
    }
    return {k: v.astype(jnp.float32) for k, v in p.items()}


def feature_model_forward(params, input_ids, input_mask, segment_ids, features, fea_mask):
    bsize, num_choices, seq_length = input_ids.shape
    del input_mask, segment_ids, fea_mask  # extand_mask / fea_extand_mask are dead code
    # Only the CLS token feeds the Pooler -> gather just that token instead of the
    # full (N, S, Dt) embedding tensor (S x less HBM gather traffic).
    # TODO(synk): pretrained BERT/RoBERTa encoder replaced by a deterministic
    # token-embedding lookup (loading a .pt checkpoint is out of scope here).
    cls_ids = input_ids[:, :, 0]                                   # (B, C)
    text_cls = jnp.take(params["emb_table"], cls_ids, axis=0)      # (B, C, Dt)
    fea_cls = features[:, :, 0, :]                                 # (B, C, Df)

    # choice-major so the kernel slices a contiguous (block_b, D) slab per choice
    text_cbd = jnp.transpose(text_cls, (1, 0, 2))                  # (C, B, Dt)
    fea_cbd = jnp.transpose(fea_cls, (1, 0, 2))                    # (C, B, Df)

    logits, probs, preds = fused_head_call(text_cbd, fea_cbd, params)  # (B,C),(B,C),(B,1)
    return logits, probs, preds[:, 0]


# --------------------------------- Main -------------------------------------- #

if __name__ == "__main__":
    B, C, S, L = 2, 4, 16, 8          # batch, num_choices, seq_length, fea_length
    DT, DF, VOCAB = 32, 48, 100       # text_emb_dim, fea_emb_dim (= features hidden), vocab

    key = jax.random.PRNGKey(0)
    k_ids, k_fea, k_par = jax.random.split(key, 3)

    input_ids = jax.random.randint(k_ids, (B, C, S), 0, VOCAB, dtype=jnp.int32)
    input_mask = jnp.ones((B, C, S), jnp.int32)
    segment_ids = jnp.zeros((B, C, S), jnp.int32)
    features = jax.random.normal(k_fea, (B, C, L, DF), dtype=jnp.float32)
    fea_mask = jnp.ones((B, C, L), jnp.int32)

    params = init_params(k_par, VOCAB, DT, DF)

    logits, probs, preds = feature_model_forward(
        params, input_ids, input_mask, segment_ids, features, fea_mask)
    jax.block_until_ready((logits, probs, preds))

    assert logits.shape == (B, C) and probs.shape == (B, C) and preds.shape == (B,)
    print("KERNEL_OK")
</pallas_src>

<mosaic_0001>
module attributes {stable_mosaic.version = 11 : i64} {
  func.func @_fused_head_softmax_kernel(%arg0: i32, %arg1: memref<4x2x32xf32, #tpu.memory_space<vmem>>, %arg2: memref<4x2x48xf32, #tpu.memory_space<vmem>>, %arg3: memref<32x32xf32, #tpu.memory_space<vmem>>, %arg4: memref<1x32xf32, #tpu.memory_space<vmem>>, %arg5: memref<48x48xf32, #tpu.memory_space<vmem>>, %arg6: memref<1x48xf32, #tpu.memory_space<vmem>>, %arg7: memref<32x48xf32, #tpu.memory_space<vmem>>, %arg8: memref<1x48xf32, #tpu.memory_space<vmem>>, %arg9: memref<1x48xf32, #tpu.memory_space<vmem>>, %arg10: memref<1x48xf32, #tpu.memory_space<vmem>>, %arg11: memref<1x48xf32, #tpu.memory_space<vmem>>, %arg12: memref<1x48xf32, #tpu.memory_space<vmem>>, %arg13: memref<1x1xf32, #tpu.memory_space<vmem>>, %arg14: memref<2x4xf32, #tpu.memory_space<vmem>>, %arg15: memref<2x4xf32, #tpu.memory_space<vmem>>, %arg16: memref<2x1xi32, #tpu.memory_space<vmem>>) attributes {dimension_semantics = [#tpu.dimension_semantics<parallel>], iteration_bounds = array<i64: 1>, scalar_prefetch = 0 : i64, scratch_operands = 0 : i64, tpu.core_type = #tpu.core_type<tc>, window_params = [{transform_indices = @transform_0, window_bounds = array<i64: 4, 2, 32>}, {transform_indices = @transform_1, window_bounds = array<i64: 4, 2, 48>}, {pipeline_mode = #tpu.pipeline_mode<synchronous>, transform_indices = @transform_2, window_bounds = array<i64: 32, 32>}, {pipeline_mode = #tpu.pipeline_mode<synchronous>, transform_indices = @transform_3, window_bounds = array<i64: 1, 32>}, {pipeline_mode = #tpu.pipeline_mode<synchronous>, transform_indices = @transform_4, window_bounds = array<i64: 48, 48>}, {pipeline_mode = #tpu.pipeline_mode<synchronous>, transform_indices = @transform_5, window_bounds = array<i64: 1, 48>}, {pipeline_mode = #tpu.pipeline_mode<synchronous>, transform_indices = @transform_6, window_bounds = array<i64: 32, 48>}, {pipeline_mode = #tpu.pipeline_mode<synchronous>, transform_indices = @transform_7, window_bounds = array<i64: 1, 48>}, {pipeline_mode = #tpu.pipeline_mode<synchronous>, transform_indices = @transform_8, window_bounds = array<i64: 1, 48>}, {pipeline_mode = #tpu.pipeline_mode<synchronous>, transform_indices = @transform_9, window_bounds = array<i64: 1, 48>}, {pipeline_mode = #tpu.pipeline_mode<synchronous>, transform_indices = @transform_10, window_bounds = array<i64: 1, 48>}, {pipeline_mode = #tpu.pipeline_mode<synchronous>, transform_indices = @transform_11, window_bounds = array<i64: 1, 48>}, {pipeline_mode = #tpu.pipeline_mode<synchronous>, transform_indices = @transform_12, window_bounds = array<i64: 1, 1>}, {transform_indices = @transform_13, window_bounds = array<i64: 2, 4>}, {transform_indices = @transform_14, window_bounds = array<i64: 2, 4>}, {transform_indices = @transform_15, window_bounds = array<i64: 2, 1>}]} {
    %c0 = arith.constant 0 : index
    %c0_0 = arith.constant 0 : index
    %0 = vector.load %arg9[%c0, %c0_0] : memref<1x48xf32, #tpu.memory_space<vmem>>, vector<1x48xf32>
    %c0_1 = arith.constant 0 : index
    %c0_2 = arith.constant 0 : index
    %1 = vector.load %arg10[%c0_1, %c0_2] : memref<1x48xf32, #tpu.memory_space<vmem>>, vector<1x48xf32>
    %2 = tpu.iota {dimensions = array<i32: 1>} : vector<2x4xi32>
    %cst = arith.constant 0.000000e+00 : f32
    %3 = vector.broadcast %cst : f32 to vector<2x4xf32>
    %c0_3 = arith.constant 0 : index
    %c0_4 = arith.constant 0 : index
    %c0_5 = arith.constant 0 : index
    %4 = vector.load %arg1[%c0_3, %c0_4, %c0_5] : memref<4x2x32xf32, #tpu.memory_space<vmem>>, vector<1x2x32xf32>
    %5 = vector.shape_cast %4 : vector<1x2x32xf32> to vector<2x32xf32>
    %c0_6 = arith.constant 0 : index
    %c0_7 = arith.constant 0 : index
    %6 = vector.load %arg3[%c0_6, %c0_7] : memref<32x32xf32, #tpu.memory_space<vmem>>, vector<32x32xf32>
    %cst_8 = arith.constant dense<0.000000e+00> : vector<2x32xf32>
    %7 = tpu.matmul %5, %6, %cst_8 {dimension_numbers = #tpu.dot_dimension_numbers<[1], [0], [0], [1], [0, 0, 1, 1], [], []>} : vector<2x32xf32>, vector<32x32xf32>, vector<2x32xf32> -> vector<2x32xf32>
    %c0_9 = arith.constant 0 : index
    %c0_10 = arith.constant 0 : index
    %8 = vector.load %arg4[%c0_9, %c0_10] : memref<1x32xf32, #tpu.memory_space<vmem>>, vector<1x32xf32>
    %9 = vector.broadcast %8 : vector<1x32xf32> to vector<2x32xf32>
    %10 = arith.addf %7, %9 : vector<2x32xf32>
    %11 = math.tanh %10 : vector<2x32xf32>
    %c0_11 = arith.constant 0 : index
    %c0_12 = arith.constant 0 : index
    %c0_13 = arith.constant 0 : index
    %12 = vector.load %arg2[%c0_11, %c0_12, %c0_13] : memref<4x2x48xf32, #tpu.memory_space<vmem>>, vector<1x2x48xf32>
    %13 = vector.shape_cast %12 : vector<1x2x48xf32> to vector<2x48xf32>
    %c0_14 = arith.constant 0 : index
    %c0_15 = arith.constant 0 : index
    %14 = vector.load %arg5[%c0_14, %c0_15] : memref<48x48xf32, #tpu.memory_space<vmem>>, vector<48x48xf32>
    %cst_16 = arith.constant dense<0.000000e+00> : vector<2x48xf32>
    %15 = tpu.matmul %13, %14, %cst_16 {dimension_numbers = #tpu.dot_dimension_numbers<[1], [0], [0], [1], [0, 0, 1, 1], [], []>} : vector<2x48xf32>, vector<48x48xf32>, vector<2x48xf32> -> vector<2x48xf32>
    %c0_17 = arith.constant 0 : index
    %c0_18 = arith.constant 0 : index
    %16 = vector.load %arg6[%c0_17, %c0_18] : memref<1x48xf32, #tpu.memory_space<vmem>>, vector<1x48xf32>
    %17 = vector.broadcast %16 : vector<1x48xf32> to vector<2x48xf32>
    %18 = arith.addf %15, %17 : vector<2x48xf32>
    %19 = math.tanh %18 : vector<2x48xf32>
    %c0_19 = arith.constant 0 : index
    %c0_20 = arith.constant 0 : index
    %20 = vector.load %arg7[%c0_19, %c0_20] : memref<32x48xf32, #tpu.memory_space<vmem>>, vector<32x48xf32>
    %cst_21 = arith.constant dense<0.000000e+00> : vector<2x48xf32>
    %21 = tpu.matmul %11, %20, %cst_21 {dimension_numbers = #tpu.dot_dimension_numbers<[1], [0], [0], [1], [0, 0, 1, 1], [], []>} : vector<2x32xf32>, vector<32x48xf32>, vector<2x48xf32> -> vector<2x48xf32>
    %c0_22 = arith.constant 0 : index
    %c0_23 = arith.constant 0 : index
    %22 = vector.load %arg8[%c0_22, %c0_23] : memref<1x48xf32, #tpu.memory_space<vmem>>, vector<1x48xf32>
    %23 = vector.broadcast %22 : vector<1x48xf32> to vector<2x48xf32>
    %24 = arith.addf %21, %23 : vector<2x48xf32>
    %cst_24 = arith.constant dense<0.000000e+00> : vector<2xf32>
    %25 = vector.multi_reduction <add>, %24, %cst_24 [1] : vector<2x48xf32> to vector<2xf32>
    %26 = vector.shape_cast %25 : vector<2xf32> to vector<2x1xf32>
    %cst_25 = arith.constant 4.800000e+01 : f32
    %27 = vector.broadcast %cst_25 : f32 to vector<2x1xf32>
    %28 = arith.divf %26, %27 : vector<2x1xf32>
    %29 = vector.broadcast %28 : vector<2x1xf32> to vector<2x48xf32>
    %30 = arith.subf %24, %29 : vector<2x48xf32>
    %31 = arith.mulf %30, %30 : vector<2x48xf32>
    %cst_26 = arith.constant dense<0.000000e+00> : vector<2xf32>
    %32 = vector.multi_reduction <add>, %31, %cst_26 [1] : vector<2x48xf32> to vector<2xf32>
    %33 = vector.shape_cast %32 : vector<2xf32> to vector<2x1xf32>
    %cst_27 = arith.constant 4.800000e+01 : f32
    %34 = vector.broadcast %cst_27 : f32 to vector<2x1xf32>
    %35 = arith.divf %33, %34 : vector<2x1xf32>
    %36 = vector.broadcast %28 : vector<2x1xf32> to vector<2x48xf32>
    %37 = arith.subf %24, %36 : vector<2x48xf32>
    %cst_28 = arith.constant 9.99999974E-6 : f32
    %38 = vector.broadcast %cst_28 : f32 to vector<2x1xf32>
    %39 = arith.addf %35, %38 : vector<2x1xf32>
    %40 = math.rsqrt %39 : vector<2x1xf32>
    %41 = vector.broadcast %40 : vector<2x1xf32> to vector<2x48xf32>
    %42 = arith.mulf %37, %41 : vector<2x48xf32>
    %43 = vector.broadcast %0 : vector<1x48xf32> to vector<2x48xf32>
    %44 = arith.mulf %42, %43 : vector<2x48xf32>
    %45 = vector.broadcast %1 : vector<1x48xf32> to vector<2x48xf32>
    %46 = arith.addf %44, %45 : vector<2x48xf32>
    %cst_29 = arith.constant dense<0.000000e+00> : vector<2xf32>
    %47 = vector.multi_reduction <add>, %19, %cst_29 [1] : vector<2x48xf32> to vector<2xf32>
    %48 = vector.shape_cast %47 : vector<2xf32> to vector<2x1xf32>
    %cst_30 = arith.constant 4.800000e+01 : f32
    %49 = vector.broadcast %cst_30 : f32 to vector<2x1xf32>
    %50 = arith.divf %48, %49 : vector<2x1xf32>
    %51 = vector.broadcast %50 : vector<2x1xf32> to vector<2x48xf32>
    %52 = arith.subf %19, %51 : vector<2x48xf32>
    %53 = arith.mulf %52, %52 : vector<2x48xf32>
    %cst_31 = arith.constant dense<0.000000e+00> : vector<2xf32>
    %54 = vector.multi_reduction <add>, %53, %cst_31 [1] : vector<2x48xf32> to vector<2xf32>
    %55 = vector.shape_cast %54 : vector<2xf32> to vector<2x1xf32>
    %cst_32 = arith.constant 4.800000e+01 : f32
    %56 = vector.broadcast %cst_32 : f32 to vector<2x1xf32>
    %57 = arith.divf %55, %56 : vector<2x1xf32>
    %58 = vector.broadcast %50 : vector<2x1xf32> to vector<2x48xf32>
    %59 = arith.subf %19, %58 : vector<2x48xf32>
    %cst_33 = arith.constant 9.99999974E-6 : f32
    %60 = vector.broadcast %cst_33 : f32 to vector<2x1xf32>
    %61 = arith.addf %57, %60 : vector<2x1xf32>
    %62 = math.rsqrt %61 : vector<2x1xf32>
    %63 = vector.broadcast %62 : vector<2x1xf32> to vector<2x48xf32>
    %64 = arith.mulf %59, %63 : vector<2x48xf32>
    %65 = vector.broadcast %0 : vector<1x48xf32> to vector<2x48xf32>
    %66 = arith.mulf %64, %65 : vector<2x48xf32>
    %67 = vector.broadcast %1 : vector<1x48xf32> to vector<2x48xf32>
    %68 = arith.addf %66, %67 : vector<2x48xf32>
    %c0_34 = arith.constant 0 : index
    %c0_35 = arith.constant 0 : index
    %69 = vector.load %arg11[%c0_34, %c0_35] : memref<1x48xf32, #tpu.memory_space<vmem>>, vector<1x48xf32>
    %70 = vector.broadcast %69 : vector<1x48xf32> to vector<2x48xf32>
    %71 = arith.mulf %46, %70 : vector<2x48xf32>
    %cst_36 = arith.constant dense<0.000000e+00> : vector<2xf32>
    %72 = vector.multi_reduction <add>, %71, %cst_36 [1] : vector<2x48xf32> to vector<2xf32>
    %73 = vector.shape_cast %72 : vector<2xf32> to vector<2x1xf32>
    %c0_37 = arith.constant 0 : index
    %c0_38 = arith.constant 0 : index
    %74 = vector.load %arg12[%c0_37, %c0_38] : memref<1x48xf32, #tpu.memory_space<vmem>>, vector<1x48xf32>
    %75 = vector.broadcast %74 : vector<1x48xf32> to vector<2x48xf32>
    %76 = arith.mulf %68, %75 : vector<2x48xf32>
    %cst_39 = arith.constant dense<0.000000e+00> : vector<2xf32>
    %77 = vector.multi_reduction <add>, %76, %cst_39 [1] : vector<2x48xf32> to vector<2xf32>
    %78 = vector.shape_cast %77 : vector<2xf32> to vector<2x1xf32>
    %79 = arith.addf %73, %78 : vector<2x1xf32>
    %c0_40 = arith.constant 0 : index
    %c0_41 = arith.constant 0 : index
    %80 = vector.load %arg13[%c0_40, %c0_41] : memref<1x1xf32, #tpu.memory_space<vmem>>, vector<1x1xf32>
    %81 = vector.broadcast %80 : vector<1x1xf32> to vector<2x1xf32>
    %82 = arith.addf %79, %81 : vector<2x1xf32>
    %c0_i32 = arith.constant 0 : i32
    %83 = vector.broadcast %c0_i32 : i32 to vector<2x4xi32>
    %84 = arith.cmpi eq, %2, %83 : vector<2x4xi32>
    %cst_42 = arith.constant 0.000000e+00 : f32
    %85 = vector.shape_cast %82 : vector<2x1xf32> to vector<2x1xf32>
    %86 = vector.broadcast %85 : vector<2x1xf32> to vector<2x4xf32>
    %87 = vector.broadcast %cst_42 : f32 to vector<2x4xf32>
    %88 = arith.select %84, %86, %87 : vector<2x4xi1>, vector<2x4xf32>
    %89 = arith.addf %3, %88 : vector<2x4xf32>
    %c1 = arith.constant 1 : index
    %c0_43 = arith.constant 0 : index
    %c0_44 = arith.constant 0 : index
    %90 = vector.load %arg1[%c1, %c0_43, %c0_44] : memref<4x2x32xf32, #tpu.memory_space<vmem>>, vector<1x2x32xf32>
    %91 = vector.shape_cast %90 : vector<1x2x32xf32> to vector<2x32xf32>
    %c0_45 = arith.constant 0 : index
    %c0_46 = arith.constant 0 : index
    %92 = vector.load %arg3[%c0_45, %c0_46] : memref<32x32xf32, #tpu.memory_space<vmem>>, vector<32x32xf32>
    %cst_47 = arith.constant dense<0.000000e+00> : vector<2x32xf32>
    %93 = tpu.matmul %91, %92, %cst_47 {dimension_numbers = #tpu.dot_dimension_numbers<[1], [0], [0], [1], [0, 0, 1, 1], [], []>} : vector<2x32xf32>, vector<32x32xf32>, vector<2x32xf32> -> vector<2x32xf32>
    %c0_48 = arith.constant 0 : index
    %c0_49 = arith.constant 0 : index
    %94 = vector.load %arg4[%c0_48, %c0_49] : memref<1x32xf32, #tpu.memory_space<vmem>>, vector<1x32xf32>
    %95 = vector.broadcast %94 : vector<1x32xf32> to vector<2x32xf32>
    %96 = arith.addf %93, %95 : vector<2x32xf32>
    %97 = math.tanh %96 : vector<2x32xf32>
    %c1_50 = arith.constant 1 : index
    %c0_51 = arith.constant 0 : index
    %c0_52 = arith.constant 0 : index
    %98 = vector.load %arg2[%c1_50, %c0_51, %c0_52] : memref<4x2x48xf32, #tpu.memory_space<vmem>>, vector<1x2x48xf32>
    %99 = vector.shape_cast %98 : vector<1x2x48xf32> to vector<2x48xf32>
    %c0_53 = arith.constant 0 : index
    %c0_54 = arith.constant 0 : index
    %100 = vector.load %arg5[%c0_53, %c0_54] : memref<48x48xf32, #tpu.memory_space<vmem>>, vector<48x48xf32>
    %cst_55 = arith.constant dense<0.000000e+00> : vector<2x48xf32>
    %101 = tpu.matmul %99, %100, %cst_55 {dimension_numbers = #tpu.dot_dimension_numbers<[1], [0], [0], [1], [0, 0, 1, 1], [], []>} : vector<2x48xf32>, vector<48x48xf32>, vector<2x48xf32> -> vector<2x48xf32>
    %c0_56 = arith.constant 0 : index
    %c0_57 = arith.constant 0 : index
    %102 = vector.load %arg6[%c0_56, %c0_57] : memref<1x48xf32, #tpu.memory_space<vmem>>, vector<1x48xf32>
    %103 = vector.broadcast %102 : vector<1x48xf32> to vector<2x48xf32>
    %104 = arith.addf %101, %103 : vector<2x48xf32>
    %105 = math.tanh %104 : vector<2x48xf32>
    %c0_58 = arith.constant 0 : index
    %c0_59 = arith.constant 0 : index
    %106 = vector.load %arg7[%c0_58, %c0_59] : memref<32x48xf32, #tpu.memory_space<vmem>>, vector<32x48xf32>
    %cst_60 = arith.constant dense<0.000000e+00> : vector<2x48xf32>
    %107 = tpu.matmul %97, %106, %cst_60 {dimension_numbers = #tpu.dot_dimension_numbers<[1], [0], [0], [1], [0, 0, 1, 1], [], []>} : vector<2x32xf32>, vector<32x48xf32>, vector<2x48xf32> -> vector<2x48xf32>
    %c0_61 = arith.constant 0 : index
    %c0_62 = arith.constant 0 : index
    %108 = vector.load %arg8[%c0_61, %c0_62] : memref<1x48xf32, #tpu.memory_space<vmem>>, vector<1x48xf32>
    %109 = vector.broadcast %108 : vector<1x48xf32> to vector<2x48xf32>
    %110 = arith.addf %107, %109 : vector<2x48xf32>
    %cst_63 = arith.constant dense<0.000000e+00> : vector<2xf32>
    %111 = vector.multi_reduction <add>, %110, %cst_63 [1] : vector<2x48xf32> to vector<2xf32>
    %112 = vector.shape_cast %111 : vector<2xf32> to vector<2x1xf32>
    %cst_64 = arith.constant 4.800000e+01 : f32
    %113 = vector.broadcast %cst_64 : f32 to vector<2x1xf32>
    %114 = arith.divf %112, %113 : vector<2x1xf32>
    %115 = vector.broadcast %114 : vector<2x1xf32> to vector<2x48xf32>
    %116 = arith.subf %110, %115 : vector<2x48xf32>
    %117 = arith.mulf %116, %116 : vector<2x48xf32>
    %cst_65 = arith.constant dense<0.000000e+00> : vector<2xf32>
    %118 = vector.multi_reduction <add>, %117, %cst_65 [1] : vector<2x48xf32> to vector<2xf32>
    %119 = vector.shape_cast %118 : vector<2xf32> to vector<2x1xf32>
    %cst_66 = arith.constant 4.800000e+01 : f32
    %120 = vector.broadcast %cst_66 : f32 to vector<2x1xf32>
    %121 = arith.divf %119, %120 : vector<2x1xf32>
    %122 = vector.broadcast %114 : vector<2x1xf32> to vector<2x48xf32>
    %123 = arith.subf %110, %122 : vector<2x48xf32>
    %cst_67 = arith.constant 9.99999974E-6 : f32
    %124 = vector.broadcast %cst_67 : f32 to vector<2x1xf32>
    %125 = arith.addf %121, %124 : vector<2x1xf32>
    %126 = math.rsqrt %125 : vector<2x1xf32>
    %127 = vector.broadcast %126 : vector<2x1xf32> to vector<2x48xf32>
    %128 = arith.mulf %123, %127 : vector<2x48xf32>
    %129 = vector.broadcast %0 : vector<1x48xf32> to vector<2x48xf32>
    %130 = arith.mulf %128, %129 : vector<2x48xf32>
    %131 = vector.broadcast %1 : vector<1x48xf32> to vector<2x48xf32>
    %132 = arith.addf %130, %131 : vector<2x48xf32>
    %cst_68 = arith.constant dense<0.000000e+00> : vector<2xf32>
    %133 = vector.multi_reduction <add>, %105, %cst_68 [1] : vector<2x48xf32> to vector<2xf32>
    %134 = vector.shape_cast %133 : vector<2xf32> to vector<2x1xf32>
    %cst_69 = arith.constant 4.800000e+01 : f32
    %135 = vector.broadcast %cst_69 : f32 to vector<2x1xf32>
    %136 = arith.divf %134, %135 : vector<2x1xf32>
    %137 = vector.broadcast %136 : vector<2x1xf32> to vector<2x48xf32>
    %138 = arith.subf %105, %137 : vector<2x48xf32>
    %139 = arith.mulf %138, %138 : vector<2x48xf32>
    %cst_70 = arith.constant dense<0.000000e+00> : vector<2xf32>
    %140 = vector.multi_reduction <add>, %139, %cst_70 [1] : vector<2x48xf32> to vector<2xf32>
    %141 = vector.shape_cast %140 : vector<2xf32> to vector<2x1xf32>
    %cst_71 = arith.constant 4.800000e+01 : f32
    %142 = vector.broadcast %cst_71 : f32 to vector<2x1xf32>
    %143 = arith.divf %141, %142 : vector<2x1xf32>
    %144 = vector.broadcast %136 : vector<2x1xf32> to vector<2x48xf32>
    %145 = arith.subf %105, %144 : vector<2x48xf32>
    %cst_72 = arith.constant 9.99999974E-6 : f32
    %146 = vector.broadcast %cst_72 : f32 to vector<2x1xf32>
    %147 = arith.addf %143, %146 : vector<2x1xf32>
    %148 = math.rsqrt %147 : vector<2x1xf32>
    %149 = vector.broadcast %148 : vector<2x1xf32> to vector<2x48xf32>
    %150 = arith.mulf %145, %149 : vector<2x48xf32>
    %151 = vector.broadcast %0 : vector<1x48xf32> to vector<2x48xf32>
    %152 = arith.mulf %150, %151 : vector<2x48xf32>
    %153 = vector.broadcast %1 : vector<1x48xf32> to vector<2x48xf32>
    %154 = arith.addf %152, %153 : vector<2x48xf32>
    %c0_73 = arith.constant 0 : index
    %c0_74 = arith.constant 0 : index
    %155 = vector.load %arg11[%c0_73, %c0_74] : memref<1x48xf32, #tpu.memory_space<vmem>>, vector<1x48xf32>
    %156 = vector.broadcast %155 : vector<1x48xf32> to vector<2x48xf32>
    %157 = arith.mulf %132, %156 : vector<2x48xf32>
    %cst_75 = arith.constant dense<0.000000e+00> : vector<2xf32>
    %158 = vector.multi_reduction <add>, %157, %cst_75 [1] : vector<2x48xf32> to vector<2xf32>
    %159 = vector.shape_cast %158 : vector<2xf32> to vector<2x1xf32>
    %c0_76 = arith.constant 0 : index
    %c0_77 = arith.constant 0 : index
    %160 = vector.load %arg12[%c0_76, %c0_77] : memref<1x48xf32, #tpu.memory_space<vmem>>, vector<1x48xf32>
    %161 = vector.broadcast %160 : vector<1x48xf32> to vector<2x48xf32>
    %162 = arith.mulf %154, %161 : vector<2x48xf32>
    %cst_78 = arith.constant dense<0.000000e+00> : vector<2xf32>
    %163 = vector.multi_reduction <add>, %162, %cst_78 [1] : vector<2x48xf32> to vector<2xf32>
    %164 = vector.shape_cast %163 : vector<2xf32> to vector<2x1xf32>
    %165 = arith.addf %159, %164 : vector<2x1xf32>
    %c0_79 = arith.constant 0 : index
    %c0_80 = arith.constant 0 : index
    %166 = vector.load %arg13[%c0_79, %c0_80] : memref<1x1xf32, #tpu.memory_space<vmem>>, vector<1x1xf32>
    %167 = vector.broadcast %166 : vector<1x1xf32> to vector<2x1xf32>
    %168 = arith.addf %165, %167 : vector<2x1xf32>
    %c1_i32 = arith.constant 1 : i32
    %169 = vector.broadcast %c1_i32 : i32 to vector<2x4xi32>
    %170 = arith.cmpi eq, %2, %169 : vector<2x4xi32>
    %cst_81 = arith.constant 0.000000e+00 : f32
    %171 = vector.shape_cast %168 : vector<2x1xf32> to vector<2x1xf32>
    %172 = vector.broadcast %171 : vector<2x1xf32> to vector<2x4xf32>
    %173 = vector.broadcast %cst_81 : f32 to vector<2x4xf32>
    %174 = arith.select %170, %172, %173 : vector<2x4xi1>, vector<2x4xf32>
    %175 = arith.addf %89, %174 : vector<2x4xf32>
    %c2 = arith.constant 2 : index
    %c0_82 = arith.constant 0 : index
    %c0_83 = arith.constant 0 : index
    %176 = vector.load %arg1[%c2, %c0_82, %c0_83] : memref<4x2x32xf32, #tpu.memory_space<vmem>>, vector<1x2x32xf32>
    %177 = vector.shape_cast %176 : vector<1x2x32xf32> to vector<2x32xf32>
    %c0_84 = arith.constant 0 : index
    %c0_85 = arith.constant 0 : index
    %178 = vector.load %arg3[%c0_84, %c0_85] : memref<32x32xf32, #tpu.memory_space<vmem>>, vector<32x32xf32>
    %cst_86 = arith.constant dense<0.000000e+00> : vector<2x32xf32>
    %179 = tpu.matmul %177, %178, %cst_86 {dimension_numbers = #tpu.dot_dimension_numbers<[1], [0], [0], [1], [0, 0, 1, 1], [], []>} : vector<2x32xf32>, vector<32x32xf32>, vector<2x32xf32> -> vector<2x32xf32>
    %c0_87 = arith.constant 0 : index
    %c0_88 = arith.constant 0 : index
    %180 = vector.load %arg4[%c0_87, %c0_88] : memref<1x32xf32, #tpu.memory_space<vmem>>, vector<1x32xf32>
    %181 = vector.broadcast %180 : vector<1x32xf32> to vector<2x32xf32>
    %182 = arith.addf %179, %181 : vector<2x32xf32>
    %183 = math.tanh %182 : vector<2x32xf32>
    %c2_89 = arith.constant 2 : index
    %c0_90 = arith.constant 0 : index
    %c0_91 = arith.constant 0 : index
    %184 = vector.load %arg2[%c2_89, %c0_90, %c0_91] : memref<4x2x48xf32, #tpu.memory_space<vmem>>, vector<1x2x48xf32>
    %185 = vector.shape_cast %184 : vector<1x2x48xf32> to vector<2x48xf32>
    %c0_92 = arith.constant 0 : index
    %c0_93 = arith.constant 0 : index
    %186 = vector.load %arg5[%c0_92, %c0_93] : memref<48x48xf32, #tpu.memory_space<vmem>>, vector<48x48xf32>
    %cst_94 = arith.constant dense<0.000000e+00> : vector<2x48xf32>
    %187 = tpu.matmul %185, %186, %cst_94 {dimension_numbers = #tpu.dot_dimension_numbers<[1], [0], [0], [1], [0, 0, 1, 1], [], []>} : vector<2x48xf32>, vector<48x48xf32>, vector<2x48xf32> -> vector<2x48xf32>
    %c0_95 = arith.constant 0 : index
    %c0_96 = arith.constant 0 : index
    %188 = vector.load %arg6[%c0_95, %c0_96] : memref<1x48xf32, #tpu.memory_space<vmem>>, vector<1x48xf32>
    %189 = vector.broadcast %188 : vector<1x48xf32> to vector<2x48xf32>
    %190 = arith.addf %187, %189 : vector<2x48xf32>
    %191 = math.tanh %190 : vector<2x48xf32>
    %c0_97 = arith.constant 0 : index
    %c0_98 = arith.constant 0 : index
    %192 = vector.load %arg7[%c0_97, %c0_98] : memref<32x48xf32, #tpu.memory_space<vmem>>, vector<32x48xf32>
    %cst_99 = arith.constant dense<0.000000e+00> : vector<2x48xf32>
    %193 = tpu.matmul %183, %192, %cst_99 {dimension_numbers = #tpu.dot_dimension_numbers<[1], [0], [0], [1], [0, 0, 1, 1], [], []>} : vector<2x32xf32>, vector<32x48xf32>, vector<2x48xf32> -> vector<2x48xf32>
    %c0_100 = arith.constant 0 : index
    %c0_101 = arith.constant 0 : index
    %194 = vector.load %arg8[%c0_100, %c0_101] : memref<1x48xf32, #tpu.memory_space<vmem>>, vector<1x48xf32>
    %195 = vector.broadcast %194 : vector<1x48xf32> to vector<2x48xf32>
    %196 = arith.addf %193, %195 : vector<2x48xf32>
    %cst_102 = arith.constant dense<0.000000e+00> : vector<2xf32>
    %197 = vector.multi_reduction <add>, %196, %cst_102 [1] : vector<2x48xf32> to vector<2xf32>
    %198 = vector.shape_cast %197 : vector<2xf32> to vector<2x1xf32>
    %cst_103 = arith.constant 4.800000e+01 : f32
    %199 = vector.broadcast %cst_103 : f32 to vector<2x1xf32>
    %200 = arith.divf %198, %199 : vector<2x1xf32>
    %201 = vector.broadcast %200 : vector<2x1xf32> to vector<2x48xf32>
    %202 = arith.subf %196, %201 : vector<2x48xf32>
    %203 = arith.mulf %202, %202 : vector<2x48xf32>
    %cst_104 = arith.constant dense<0.000000e+00> : vector<2xf32>
    %204 = vector.multi_reduction <add>, %203, %cst_104 [1] : vector<2x48xf32> to vector<2xf32>
    %205 = vector.shape_cast %204 : vector<2xf32> to vector<2x1xf32>
    %cst_105 = arith.constant 4.800000e+01 : f32
    %206 = vector.broadcast %cst_105 : f32 to vector<2x1xf32>
    %207 = arith.divf %205, %206 : vector<2x1xf32>
    %208 = vector.broadcast %200 : vector<2x1xf32> to vector<2x48xf32>
    %209 = arith.subf %196, %208 : vector<2x48xf32>
    %cst_106 = arith.constant 9.99999974E-6 : f32
    %210 = vector.broadcast %cst_106 : f32 to vector<2x1xf32>
    %211 = arith.addf %207, %210 : vector<2x1xf32>
    %212 = math.rsqrt %211 : vector<2x1xf32>
    %213 = vector.broadcast %212 : vector<2x1xf32> to vector<2x48xf32>
    %214 = arith.mulf %209, %213 : vector<2x48xf32>
    %215 = vector.broadcast %0 : vector<1x48xf32> to vector<2x48xf32>
    %216 = arith.mulf %214, %215 : vector<2x48xf32>
    %217 = vector.broadcast %1 : vector<1x48xf32> to vector<2x48xf32>
    %218 = arith.addf %216, %217 : vector<2x48xf32>
    %cst_107 = arith.constant dense<0.000000e+00> : vector<2xf32>
    %219 = vector.multi_reduction <add>, %191, %cst_107 [1] : vector<2x48xf32> to vector<2xf32>
    %220 = vector.shape_cast %219 : vector<2xf32> to vector<2x1xf32>
    %cst_108 = arith.constant 4.800000e+01 : f32
    %221 = vector.broadcast %cst_108 : f32 to vector<2x1xf32>
    %222 = arith.divf %220, %221 : vector<2x1xf32>
    %223 = vector.broadcast %222 : vector<2x1xf32> to vector<2x48xf32>
    %224 = arith.subf %191, %223 : vector<2x48xf32>
    %225 = arith.mulf %224, %224 : vector<2x48xf32>
    %cst_109 = arith.constant dense<0.000000e+00> : vector<2xf32>
    %226 = vector.multi_reduction <add>, %225, %cst_109 [1] : vector<2x48xf32> to vector<2xf32>
    %227 = vector.shape_cast %226 : vector<2xf32> to vector<2x1xf32>
    %cst_110 = arith.constant 4.800000e+01 : f32
    %228 = vector.broadcast %cst_110 : f32 to vector<2x1xf32>
    %229 = arith.divf %227, %228 : vector<2x1xf32>
    %230 = vector.broadcast %222 : vector<2x1xf32> to vector<2x48xf32>
    %231 = arith.subf %191, %230 : vector<2x48xf32>
    %cst_111 = arith.constant 9.99999974E-6 : f32
    %232 = vector.broadcast %cst_111 : f32 to vector<2x1xf32>
    %233 = arith.addf %229, %232 : vector<2x1xf32>
    %234 = math.rsqrt %233 : vector<2x1xf32>
    %235 = vector.broadcast %234 : vector<2x1xf32> to vector<2x48xf32>
    %236 = arith.mulf %231, %235 : vector<2x48xf32>
    %237 = vector.broadcast %0 : vector<1x48xf32> to vector<2x48xf32>
    %238 = arith.mulf %236, %237 : vector<2x48xf32>
    %239 = vector.broadcast %1 : vector<1x48xf32> to vector<2x48xf32>
    %240 = arith.addf %238, %239 : vector<2x48xf32>
    %c0_112 = arith.constant 0 : index
    %c0_113 = arith.constant 0 : index
    %241 = vector.load %arg11[%c0_112, %c0_113] : memref<1x48xf32, #tpu.memory_space<vmem>>, vector<1x48xf32>
    %242 = vector.broadcast %241 : vector<1x48xf32> to vector<2x48xf32>
    %243 = arith.mulf %218, %242 : vector<2x48xf32>
    %cst_114 = arith.constant dense<0.000000e+00> : vector<2xf32>
    %244 = vector.multi_reduction <add>, %243, %cst_114 [1] : vector<2x48xf32> to vector<2xf32>
    %245 = vector.shape_cast %244 : vector<2xf32> to vector<2x1xf32>
    %c0_115 = arith.constant 0 : index
    %c0_116 = arith.constant 0 : index
    %246 = vector.load %arg12[%c0_115, %c0_116] : memref<1x48xf32, #tpu.memory_space<vmem>>, vector<1x48xf32>
    %247 = vector.broadcast %246 : vector<1x48xf32> to vector<2x48xf32>
    %248 = arith.mulf %240, %247 : vector<2x48xf32>
    %cst_117 = arith.constant dense<0.000000e+00> : vector<2xf32>
    %249 = vector.multi_reduction <add>, %248, %cst_117 [1] : vector<2x48xf32> to vector<2xf32>
    %250 = vector.shape_cast %249 : vector<2xf32> to vector<2x1xf32>
    %251 = arith.addf %245, %250 : vector<2x1xf32>
    %c0_118 = arith.constant 0 : index
    %c0_119 = arith.constant 0 : index
    %252 = vector.load %arg13[%c0_118, %c0_119] : memref<1x1xf32, #tpu.memory_space<vmem>>, vector<1x1xf32>
    %253 = vector.broadcast %252 : vector<1x1xf32> to vector<2x1xf32>
    %254 = arith.addf %251, %253 : vector<2x1xf32>
    %c2_i32 = arith.constant 2 : i32
    %255 = vector.broadcast %c2_i32 : i32 to vector<2x4xi32>
    %256 = arith.cmpi eq, %2, %255 : vector<2x4xi32>
    %cst_120 = arith.constant 0.000000e+00 : f32
    %257 = vector.shape_cast %254 : vector<2x1xf32> to vector<2x1xf32>
    %258 = vector.broadcast %257 : vector<2x1xf32> to vector<2x4xf32>
    %259 = vector.broadcast %cst_120 : f32 to vector<2x4xf32>
    %260 = arith.select %256, %258, %259 : vector<2x4xi1>, vector<2x4xf32>
    %261 = arith.addf %175, %260 : vector<2x4xf32>
    %c3 = arith.constant 3 : index
    %c0_121 = arith.constant 0 : index
    %c0_122 = arith.constant 0 : index
    %262 = vector.load %arg1[%c3, %c0_121, %c0_122] : memref<4x2x32xf32, #tpu.memory_space<vmem>>, vector<1x2x32xf32>
    %263 = vector.shape_cast %262 : vector<1x2x32xf32> to vector<2x32xf32>
    %c0_123 = arith.constant 0 : index
    %c0_124 = arith.constant 0 : index
    %264 = vector.load %arg3[%c0_123, %c0_124] : memref<32x32xf32, #tpu.memory_space<vmem>>, vector<32x32xf32>
    %cst_125 = arith.constant dense<0.000000e+00> : vector<2x32xf32>
    %265 = tpu.matmul %263, %264, %cst_125 {dimension_numbers = #tpu.dot_dimension_numbers<[1], [0], [0], [1], [0, 0, 1, 1], [], []>} : vector<2x32xf32>, vector<32x32xf32>, vector<2x32xf32> -> vector<2x32xf32>
    %c0_126 = arith.constant 0 : index
    %c0_127 = arith.constant 0 : index
    %266 = vector.load %arg4[%c0_126, %c0_127] : memref<1x32xf32, #tpu.memory_space<vmem>>, vector<1x32xf32>
    %267 = vector.broadcast %266 : vector<1x32xf32> to vector<2x32xf32>
    %268 = arith.addf %265, %267 : vector<2x32xf32>
    %269 = math.tanh %268 : vector<2x32xf32>
    %c3_128 = arith.constant 3 : index
    %c0_129 = arith.constant 0 : index
    %c0_130 = arith.constant 0 : index
    %270 = vector.load %arg2[%c3_128, %c0_129, %c0_130] : memref<4x2x48xf32, #tpu.memory_space<vmem>>, vector<1x2x48xf32>
    %271 = vector.shape_cast %270 : vector<1x2x48xf32> to vector<2x48xf32>
    %c0_131 = arith.constant 0 : index
    %c0_132 = arith.constant 0 : index
    %272 = vector.load %arg5[%c0_131, %c0_132] : memref<48x48xf32, #tpu.memory_space<vmem>>, vector<48x48xf32>
    %cst_133 = arith.constant dense<0.000000e+00> : vector<2x48xf32>
    %273 = tpu.matmul %271, %272, %cst_133 {dimension_numbers = #tpu.dot_dimension_numbers<[1], [0], [0], [1], [0, 0, 1, 1], [], []>} : vector<2x48xf32>, vector<48x48xf32>, vector<2x48xf32> -> vector<2x48xf32>
    %c0_134 = arith.constant 0 : index
    %c0_135 = arith.constant 0 : index
    %274 = vector.load %arg6[%c0_134, %c0_135] : memref<1x48xf32, #tpu.memory_space<vmem>>, vector<1x48xf32>
    %275 = vector.broadcast %274 : vector<1x48xf32> to vector<2x48xf32>
    %276 = arith.addf %273, %275 : vector<2x48xf32>
    %277 = math.tanh %276 : vector<2x48xf32>
    %c0_136 = arith.constant 0 : index
    %c0_137 = arith.constant 0 : index
    %278 = vector.load %arg7[%c0_136, %c0_137] : memref<32x48xf32, #tpu.memory_space<vmem>>, vector<32x48xf32>
    %cst_138 = arith.constant dense<0.000000e+00> : vector<2x48xf32>
    %279 = tpu.matmul %269, %278, %cst_138 {dimension_numbers = #tpu.dot_dimension_numbers<[1], [0], [0], [1], [0, 0, 1, 1], [], []>} : vector<2x32xf32>, vector<32x48xf32>, vector<2x48xf32> -> vector<2x48xf32>
    %c0_139 = arith.constant 0 : index
    %c0_140 = arith.constant 0 : index
    %280 = vector.load %arg8[%c0_139, %c0_140] : memref<1x48xf32, #tpu.memory_space<vmem>>, vector<1x48xf32>
    %281 = vector.broadcast %280 : vector<1x48xf32> to vector<2x48xf32>
    %282 = arith.addf %279, %281 : vector<2x48xf32>
    %cst_141 = arith.constant dense<0.000000e+00> : vector<2xf32>
    %283 = vector.multi_reduction <add>, %282, %cst_141 [1] : vector<2x48xf32> to vector<2xf32>
    %284 = vector.shape_cast %283 : vector<2xf32> to vector<2x1xf32>
    %cst_142 = arith.constant 4.800000e+01 : f32
    %285 = vector.broadcast %cst_142 : f32 to vector<2x1xf32>
    %286 = arith.divf %284, %285 : vector<2x1xf32>
    %287 = vector.broadcast %286 : vector<2x1xf32> to vector<2x48xf32>
    %288 = arith.subf %282, %287 : vector<2x48xf32>
    %289 = arith.mulf %288, %288 : vector<2x48xf32>
    %cst_143 = arith.constant dense<0.000000e+00> : vector<2xf32>
    %290 = vector.multi_reduction <add>, %289, %cst_143 [1] : vector<2x48xf32> to vector<2xf32>
    %291 = vector.shape_cast %290 : vector<2xf32> to vector<2x1xf32>
    %cst_144 = arith.constant 4.800000e+01 : f32
    %292 = vector.broadcast %cst_144 : f32 to vector<2x1xf32>
    %293 = arith.divf %291, %292 : vector<2x1xf32>
    %294 = vector.broadcast %286 : vector<2x1xf32> to vector<2x48xf32>
    %295 = arith.subf %282, %294 : vector<2x48xf32>
    %cst_145 = arith.constant 9.99999974E-6 : f32
    %296 = vector.broadcast %cst_145 : f32 to vector<2x1xf32>
    %297 = arith.addf %293, %296 : vector<2x1xf32>
    %298 = math.rsqrt %297 : vector<2x1xf32>
    %299 = vector.broadcast %298 : vector<2x1xf32> to vector<2x48xf32>
    %300 = arith.mulf %295, %299 : vector<2x48xf32>
    %301 = vector.broadcast %0 : vector<1x48xf32> to vector<2x48xf32>
    %302 = arith.mulf %300, %301 : vector<2x48xf32>
    %303 = vector.broadcast %1 : vector<1x48xf32> to vector<2x48xf32>
    %304 = arith.addf %302, %303 : vector<2x48xf32>
    %cst_146 = arith.constant dense<0.000000e+00> : vector<2xf32>
    %305 = vector.multi_reduction <add>, %277, %cst_146 [1] : vector<2x48xf32> to vector<2xf32>
    %306 = vector.shape_cast %305 : vector<2xf32> to vector<2x1xf32>
    %cst_147 = arith.constant 4.800000e+01 : f32
    %307 = vector.broadcast %cst_147 : f32 to vector<2x1xf32>
    %308 = arith.divf %306, %307 : vector<2x1xf32>
    %309 = vector.broadcast %308 : vector<2x1xf32> to vector<2x48xf32>
    %310 = arith.subf %277, %309 : vector<2x48xf32>
    %311 = arith.mulf %310, %310 : vector<2x48xf32>
    %cst_148 = arith.constant dense<0.000000e+00> : vector<2xf32>
    %312 = vector.multi_reduction <add>, %311, %cst_148 [1] : vector<2x48xf32> to vector<2xf32>
    %313 = vector.shape_cast %312 : vector<2xf32> to vector<2x1xf32>
    %cst_149 = arith.constant 4.800000e+01 : f32
    %314 = vector.broadcast %cst_149 : f32 to vector<2x1xf32>
    %315 = arith.divf %313, %314 : vector<2x1xf32>
    %316 = vector.broadcast %308 : vector<2x1xf32> to vector<2x48xf32>
    %317 = arith.subf %277, %316 : vector<2x48xf32>
    %cst_150 = arith.constant 9.99999974E-6 : f32
    %318 = vector.broadcast %cst_150 : f32 to vector<2x1xf32>
    %319 = arith.addf %315, %318 : vector<2x1xf32>
    %320 = math.rsqrt %319 : vector<2x1xf32>
    %321 = vector.broadcast %320 : vector<2x1xf32> to vector<2x48xf32>
    %322 = arith.mulf %317, %321 : vector<2x48xf32>
    %323 = vector.broadcast %0 : vector<1x48xf32> to vector<2x48xf32>
    %324 = arith.mulf %322, %323 : vector<2x48xf32>
    %325 = vector.broadcast %1 : vector<1x48xf32> to vector<2x48xf32>
    %326 = arith.addf %324, %325 : vector<2x48xf32>
    %c0_151 = arith.constant 0 : index
    %c0_152 = arith.constant 0 : index
    %327 = vector.load %arg11[%c0_151, %c0_152] : memref<1x48xf32, #tpu.memory_space<vmem>>, vector<1x48xf32>
    %328 = vector.broadcast %327 : vector<1x48xf32> to vector<2x48xf32>
    %329 = arith.mulf %304, %328 : vector<2x48xf32>
    %cst_153 = arith.constant dense<0.000000e+00> : vector<2xf32>
    %330 = vector.multi_reduction <add>, %329, %cst_153 [1] : vector<2x48xf32> to vector<2xf32>
    %331 = vector.shape_cast %330 : vector<2xf32> to vector<2x1xf32>
    %c0_154 = arith.constant 0 : index
    %c0_155 = arith.constant 0 : index
    %332 = vector.load %arg12[%c0_154, %c0_155] : memref<1x48xf32, #tpu.memory_space<vmem>>, vector<1x48xf32>
    %333 = vector.broadcast %332 : vector<1x48xf32> to vector<2x48xf32>
    %334 = arith.mulf %326, %333 : vector<2x48xf32>
    %cst_156 = arith.constant dense<0.000000e+00> : vector<2xf32>
    %335 = vector.multi_reduction <add>, %334, %cst_156 [1] : vector<2x48xf32> to vector<2xf32>
    %336 = vector.shape_cast %335 : vector<2xf32> to vector<2x1xf32>
    %337 = arith.addf %331, %336 : vector<2x1xf32>
    %c0_157 = arith.constant 0 : index
    %c0_158 = arith.constant 0 : index
    %338 = vector.load %arg13[%c0_157, %c0_158] : memref<1x1xf32, #tpu.memory_space<vmem>>, vector<1x1xf32>
    %339 = vector.broadcast %338 : vector<1x1xf32> to vector<2x1xf32>
    %340 = arith.addf %337, %339 : vector<2x1xf32>
    %c3_i32 = arith.constant 3 : i32
    %341 = vector.broadcast %c3_i32 : i32 to vector<2x4xi32>
    %342 = arith.cmpi eq, %2, %341 : vector<2x4xi32>
    %cst_159 = arith.constant 0.000000e+00 : f32
    %343 = vector.shape_cast %340 : vector<2x1xf32> to vector<2x1xf32>
    %344 = vector.broadcast %343 : vector<2x1xf32> to vector<2x4xf32>
    %345 = vector.broadcast %cst_159 : f32 to vector<2x4xf32>
    %346 = arith.select %342, %344, %345 : vector<2x4xi1>, vector<2x4xf32>
    %347 = arith.addf %261, %346 : vector<2x4xf32>
    %c0_160 = arith.constant 0 : index
    %c0_161 = arith.constant 0 : index
    %348 = vector.load %arg14[%c0_160, %c0_161] : memref<2x4xf32, #tpu.memory_space<vmem>>, vector<2x4xf32>
    tpu.vector_store %arg14[%c0_160, %c0_161], %347 {strides = array<i32>} : memref<2x4xf32, #tpu.memory_space<vmem>>, vector<2x4xf32>,
    %cst_162 = arith.constant dense<0xFF800000> : vector<2xf32>
    %349 = vector.multi_reduction <maximumf>, %347, %cst_162 [1] : vector<2x4xf32> to vector<2xf32>
    %350 = vector.shape_cast %349 : vector<2xf32> to vector<2x1xf32>
    %351 = vector.broadcast %350 : vector<2x1xf32> to vector<2x4xf32>
    %352 = arith.subf %347, %351 : vector<2x4xf32>
    %353 = math.exp %352 : vector<2x4xf32>
    %cst_163 = arith.constant dense<0.000000e+00> : vector<2xf32>
    %354 = vector.multi_reduction <add>, %353, %cst_163 [1] : vector<2x4xf32> to vector<2xf32>
    %355 = vector.shape_cast %354 : vector<2xf32> to vector<2x1xf32>
    %356 = tpu.reciprocal %355 {approx = true} : vector<2x1xf32> -> vector<2x1xf32>
    %357 = arith.mulf %355, %356 : vector<2x1xf32>
    %cst_164 = arith.constant 2.000000e+00 : f32
    %358 = vector.broadcast %cst_164 : f32 to vector<2x1xf32>
    %359 = arith.subf %358, %357 : vector<2x1xf32>
    %360 = arith.mulf %356, %359 : vector<2x1xf32>
    %361 = vector.broadcast %360 : vector<2x1xf32> to vector<2x4xf32>
    %362 = arith.mulf %353, %361 : vector<2x4xf32>
    %c0_165 = arith.constant 0 : index
    %c0_166 = arith.constant 0 : index
    %363 = vector.load %arg15[%c0_165, %c0_166] : memref<2x4xf32, #tpu.memory_space<vmem>>, vector<2x4xf32>
    tpu.vector_store %arg15[%c0_165, %c0_166], %362 {strides = array<i32>} : memref<2x4xf32, #tpu.memory_space<vmem>>, vector<2x4xf32>,
    %364 = vector.broadcast %350 : vector<2x1xf32> to vector<2x4xf32>
    %365 = arith.cmpf oeq, %347, %364 : vector<2x4xf32>
    %c4_i32 = arith.constant 4 : i32
    %366 = vector.broadcast %c4_i32 : i32 to vector<2x4xi32>
    %367 = arith.select %365, %2, %366 : vector<2x4xi1>, vector<2x4xi32>
    %cst_167 = arith.constant dense<2147483647> : vector<2xi32>
    %368 = vector.multi_reduction <minsi>, %367, %cst_167 [1] : vector<2x4xi32> to vector<2xi32>
    %369 = vector.shape_cast %368 : vector<2xi32> to vector<2x1xi32>
    %c0_168 = arith.constant 0 : index
    %c0_169 = arith.constant 0 : index
    %370 = vector.load %arg16[%c0_168, %c0_169] : memref<2x1xi32, #tpu.memory_space<vmem>>, vector<2x1xi32>
    tpu.vector_store %arg16[%c0_168, %c0_169], %369 {strides = array<i32>} : memref<2x1xi32, #tpu.memory_space<vmem>>, vector<2x1xi32>,
    return
  }
  func.func @transform_0(%arg0: i32) -> (i32, i32, i32) {
    %c0_i32 = arith.constant 0 : i32
    %c0_i32_0 = arith.constant 0 : i32
    %c0_i32_1 = arith.constant 0 : i32
    return %c0_i32, %arg0, %c0_i32_0 : i32, i32, i32
  }
  func.func @transform_1(%arg0: i32) -> (i32, i32, i32) {
    %c0_i32 = arith.constant 0 : i32
    %c0_i32_0 = arith.constant 0 : i32
    %c0_i32_1 = arith.constant 0 : i32
    return %c0_i32, %arg0, %c0_i32_0 : i32, i32, i32
  }
  func.func @transform_2(%arg0: i32) -> (i32, i32) {
    %c0_i32 = arith.constant 0 : i32
    %c0_i32_0 = arith.constant 0 : i32
    %c0_i32_1 = arith.constant 0 : i32
    return %c0_i32, %c0_i32_0 : i32, i32
  }
  func.func @transform_3(%arg0: i32) -> (i32, i32) {
    %c0_i32 = arith.constant 0 : i32
    %c0_i32_0 = arith.constant 0 : i32
    %c0_i32_1 = arith.constant 0 : i32
    return %c0_i32, %c0_i32_0 : i32, i32
  }
  func.func @transform_4(%arg0: i32) -> (i32, i32) {
    %c0_i32 = arith.constant 0 : i32
    %c0_i32_0 = arith.constant 0 : i32
    %c0_i32_1 = arith.constant 0 : i32
    return %c0_i32, %c0_i32_0 : i32, i32
  }
  func.func @transform_5(%arg0: i32) -> (i32, i32) {
    %c0_i32 = arith.constant 0 : i32
    %c0_i32_0 = arith.constant 0 : i32
    %c0_i32_1 = arith.constant 0 : i32
    return %c0_i32, %c0_i32_0 : i32, i32
  }
  func.func @transform_6(%arg0: i32) -> (i32, i32) {
    %c0_i32 = arith.constant 0 : i32
    %c0_i32_0 = arith.constant 0 : i32
    %c0_i32_1 = arith.constant 0 : i32
    return %c0_i32, %c0_i32_0 : i32, i32
  }
  func.func @transform_7(%arg0: i32) -> (i32, i32) {
    %c0_i32 = arith.constant 0 : i32
    %c0_i32_0 = arith.constant 0 : i32
    %c0_i32_1 = arith.constant 0 : i32
    return %c0_i32, %c0_i32_0 : i32, i32
  }
  func.func @transform_8(%arg0: i32) -> (i32, i32) {
    %c0_i32 = arith.constant 0 : i32
    %c0_i32_0 = arith.constant 0 : i32
    %c0_i32_1 = arith.constant 0 : i32
    return %c0_i32, %c0_i32_0 : i32, i32
  }
  func.func @transform_9(%arg0: i32) -> (i32, i32) {
    %c0_i32 = arith.constant 0 : i32
    %c0_i32_0 = arith.constant 0 : i32
    %c0_i32_1 = arith.constant 0 : i32
    return %c0_i32, %c0_i32_0 : i32, i32
  }
  func.func @transform_10(%arg0: i32) -> (i32, i32) {
    %c0_i32 = arith.constant 0 : i32
    %c0_i32_0 = arith.constant 0 : i32
    %c0_i32_1 = arith.constant 0 : i32
    return %c0_i32, %c0_i32_0 : i32, i32
  }
  func.func @transform_11(%arg0: i32) -> (i32, i32) {
    %c0_i32 = arith.constant 0 : i32
    %c0_i32_0 = arith.constant 0 : i32
    %c0_i32_1 = arith.constant 0 : i32
    return %c0_i32, %c0_i32_0 : i32, i32
  }
  func.func @transform_12(%arg0: i32) -> (i32, i32) {
    %c0_i32 = arith.constant 0 : i32
    %c0_i32_0 = arith.constant 0 : i32
    %c0_i32_1 = arith.constant 0 : i32
    return %c0_i32, %c0_i32_0 : i32, i32
  }
  func.func @transform_13(%arg0: i32) -> (i32, i32) {
    %c0_i32 = arith.constant 0 : i32
    %c0_i32_0 = arith.constant 0 : i32
    return %arg0, %c0_i32 : i32, i32
  }
  func.func @transform_14(%arg0: i32) -> (i32, i32) {
    %c0_i32 = arith.constant 0 : i32
    %c0_i32_0 = arith.constant 0 : i32
    return %arg0, %c0_i32 : i32, i32
  }
  func.func @transform_15(%arg0: i32) -> (i32, i32) {
    %c0_i32 = arith.constant 0 : i32
    %c0_i32_0 = arith.constant 0 : i32
    return %arg0, %c0_i32 : i32, i32
  }
}

</mosaic_0001>

<llo_original>
// kernel: tpu_custom_call.1
$region0: #{tpu_custom_call.1}
  #allocation0 [shape = 'u32[]', space=smem, size = 0x4, offset = 0x4, fixed_abs, tag = 'smem constant byte address 0x4 - core index']
  #allocation1 [shape = 'u32[144,128]{1,0:T(1,128)}', space=vmem, size = 0x12000, scoped, tag = 'internal scratch']
  #allocation2 [shape = 'f32[1,1]{1,0:T(1,128)S(1)}', space=vmem, size = 0x200, scoped, tag = 'scoped memory for tpu_custom_call.1']
  %s0 = inlined_call_operand.hbm [shape: f32[4,2,32], index: 0, kind: input, shape index: {}]
  %s1 = inlined_call_operand.hbm [shape: f32[4,2,48], index: 1, kind: input, shape index: {}]
  %s2 = inlined_call_operand.hbm [shape: f32[32,32], index: 2, kind: input, shape index: {}]
  %s3 = inlined_call_operand.vmem [shape: f32[1,32], index: 3, kind: input, shape index: {}]
  %s4 = inlined_call_operand.hbm [shape: f32[48,48], index: 4, kind: input, shape index: {}]
  %s5 = inlined_call_operand.vmem [shape: f32[1,48], index: 5, kind: input, shape index: {}]
  %s6 = inlined_call_operand.hbm [shape: f32[32,48], index: 6, kind: input, shape index: {}]
  %s7 = inlined_call_operand.vmem [shape: f32[1,48], index: 7, kind: input, shape index: {}]
  %s8 = inlined_call_operand.vmem [shape: f32[1,48], index: 8, kind: input, shape index: {}]
  %s9 = inlined_call_operand.vmem [shape: f32[1,48], index: 9, kind: input, shape index: {}]
  %s10 = inlined_call_operand.vmem [shape: f32[1,48], index: 10, kind: input, shape index: {}]
  %s11 = inlined_call_operand.vmem [shape: f32[1,48], index: 11, kind: input, shape index: {}]
  %s12 = inlined_call_operand.<no memory space> [shape: f32[1,1], index: 12, kind: input, shape index: {}]
  %s13 = inlined_call_operand.hbm [shape: f32[2,4], index: 13, kind: output, shape index: {0}]
  %s14 = inlined_call_operand.hbm [shape: f32[2,4], index: 14, kind: output, shape index: {1}]
  %s15 = inlined_call_operand.vmem [shape: s32[2,1], index: 15, kind: output, shape index: {2}]
  %16 = xla_tuple %s13, %s14, %s15
  %s17 = sld [smem:[#allocation0]]
  $region98: #{tpu_custom_call.1} parent=0
    _
  %s19 = ssub.s32 1, %s17
  %s20 = scalar_select 0, %s19, %s17
  %v21 = vstv %s12
  %22 = vst [vmem:[#allocation2] sm:$0x1] %v21
  $region1: #{tpu_custom_call.1} parent=0
    #allocation3 [shape = 'u8[4096]{0}', space=vmem, size = 0x1000, scoped, tag = 'input window, operand 0, single buffered']
    #allocation4 [shape = 's32[1]{0}', space=sflag, size = 0x4, scoped, tag = 'scoped memory for tpu_custom_call.1']
    #allocation5 [shape = 's32[1]{0}', space=sflag, size = 0x4, scoped, tag = 'scoped memory for tpu_custom_call.1']
    #allocation6 [shape = 'u8[4096]{0}', space=vmem, size = 0x1000, scoped, tag = 'input window, operand 1, single buffered']
    #allocation7 [shape = 's32[1]{0}', space=sflag, size = 0x4, scoped, tag = 'scoped memory for tpu_custom_call.1']
    #allocation8 [shape = 'u8[16384]{0}', space=vmem, size = 0x4000, scoped, tag = 'input window, operand 2, single buffered']
    #allocation9 [shape = 'u8[24576]{0}', space=vmem, size = 0x6000, scoped, tag = 'input window, operand 4, single buffered']
    #allocation10 [shape = 's32[1]{0}', space=sflag, size = 0x4, scoped, tag = 'scoped memory for tpu_custom_call.1']
    #allocation11 [shape = 'u8[16384]{0}', space=vmem, size = 0x4000, scoped, tag = 'input window, operand 6, single buffered']
    #allocation12 [shape = 'u8[1024]{0}', space=vmem, size = 0x400, scoped, tag = 'output window, operand 0, single buffered']
    #allocation13 [shape = 'u8[1024]{0}', space=vmem, size = 0x400, scoped, tag = 'output window, operand 1, single buffered']
    #allocation14 [shape = 's32[1]{0}', space=sflag, size = 0x4, scoped, tag = 'scoped memory for tpu_custom_call.1']
    %23 = vsyncpa [#allocation4], 0
    %24 = vsyncpa [#allocation7], 0
    %25 = vsyncpa [#allocation10], 0
    %26 = vsyncpa [#allocation5], 0
    %27 = vsyncpa [#allocation14], 0
    // Predicated region
    $region2: #{tpu_custom_call.1} parent=1 // pred_check
      _
    $region3: #{tpu_custom_call.1} parent=1 // pred_check_branch
      %29 = sbr.rel (0) target = $region5
    $region4: #{tpu_custom_call.1} parent=1 // pred_region
      %s31 = ssub.s32 128, 128
      %32 = vsyncadd [#allocation4], %s31
      %s33 = sshll.u32 [#allocation3], 4
      %s34 = int_to_ptr.vmem [resolvable:$true] %s33
      %39 = dma.hbm_to_vmem [thread:$0]  %s0, 128, %s34, [#allocation4], 32, 32, 2
    $region5: #{tpu_custom_call.1} parent=1 // pred_fallthru
      _
    // Predicated region
    $region6: #{tpu_custom_call.1} parent=1 // pred_check
      _
    $region7: #{tpu_custom_call.1} parent=1 // pred_check_branch
      %41 = sbr.rel (0) target = $region9
    $region8: #{tpu_custom_call.1} parent=1 // pred_region
      %s43 = ssub.s32 128, 128
      %44 = vsyncadd [#allocation7], %s43
      %s45 = sshll.u32 [#allocation6], 4
      %s46 = int_to_ptr.vmem [resolvable:$true] %s45
      %51 = dma.hbm_to_vmem [thread:$0]  %s1, 128, %s46, [#allocation7], 32, 32, 2
    $region9: #{tpu_custom_call.1} parent=1 // pred_fallthru
      _
    // Predicated region
    $region10: #{tpu_custom_call.1} parent=1 // pred_check
      _
    $region11: #{tpu_custom_call.1} parent=1 // pred_check_branch
      %53 = sbr.rel (0) target = $region13
    $region12: #{tpu_custom_call.1} parent=1 // pred_region
      %s55 = ssub.s32 512, 512
      %56 = vsyncadd [#allocation7], %s55
      %s57 = sshll.u32 [#allocation8], 4
      %s58 = int_to_ptr.vmem [resolvable:$true] %s57
      %63 = dma.hbm_to_vmem [thread:$0]  %s2, 512, %s58, [#allocation7], 128, 128, 8
    $region13: #{tpu_custom_call.1} parent=1 // pred_fallthru
      _
    // Predicated region
    $region14: #{tpu_custom_call.1} parent=1 // pred_check
      _
    $region15: #{tpu_custom_call.1} parent=1 // pred_check_branch
      %65 = sbr.rel (0) target = $region17
    $region16: #{tpu_custom_call.1} parent=1 // pred_region
      _
    $region17: #{tpu_custom_call.1} parent=1 // pred_fallthru
      _
    // Predicated region
    $region18: #{tpu_custom_call.1} parent=1 // pred_check
      _
    $region19: #{tpu_custom_call.1} parent=1 // pred_check_branch
      %67 = sbr.rel (0) target = $region21
    $region20: #{tpu_custom_call.1} parent=1 // pred_region
      %s69 = ssub.s32 768, 768
      %70 = vsyncadd [#allocation10], %s69
      %s71 = sshll.u32 [#allocation9], 4
      %s72 = int_to_ptr.vmem [resolvable:$true] %s71
      %77 = dma.hbm_to_vmem [thread:$0]  %s4, 768, %s72, [#allocation10], 128, 128, 8
    $region21: #{tpu_custom_call.1} parent=1 // pred_fallthru
      _
    // Predicated region
    $region22: #{tpu_custom_call.1} parent=1 // pred_check
      _
    $region23: #{tpu_custom_call.1} parent=1 // pred_check_branch
      %79 = sbr.rel (0) target = $region25
    $region24: #{tpu_custom_call.1} parent=1 // pred_region
      _
    $region25: #{tpu_custom_call.1} parent=1 // pred_fallthru
      _
    // Predicated region
    $region26: #{tpu_custom_call.1} parent=1 // pred_check
      _
    $region27: #{tpu_custom_call.1} parent=1 // pred_check_branch
      %81 = sbr.rel (0) target = $region29
    $region28: #{tpu_custom_call.1} parent=1 // pred_region
      %s83 = ssub.s32 512, 512
      %84 = vsyncadd [#allocation10], %s83
      %s85 = sshll.u32 [#allocation11], 4
      %s86 = int_to_ptr.vmem [resolvable:$true] %s85
      %91 = dma.hbm_to_vmem [thread:$0]  %s6, 512, %s86, [#allocation10], 128, 128, 8
    $region29: #{tpu_custom_call.1} parent=1 // pred_fallthru
      _
    // Predicated region
    $region30: #{tpu_custom_call.1} parent=1 // pred_check
      _
    $region31: #{tpu_custom_call.1} parent=1 // pred_check_branch
      %93 = sbr.rel (0) target = $region33
    $region32: #{tpu_custom_call.1} parent=1 // pred_region
      _
    $region33: #{tpu_custom_call.1} parent=1 // pred_fallthru
      _
    // Predicated region
    $region34: #{tpu_custom_call.1} parent=1 // pred_check
      _
    $region35: #{tpu_custom_call.1} parent=1 // pred_check_branch
      %95 = sbr.rel (0) target = $region37
    $region36: #{tpu_custom_call.1} parent=1 // pred_region
      _
    $region37: #{tpu_custom_call.1} parent=1 // pred_fallthru
      _
    // Predicated region
    $region38: #{tpu_custom_call.1} parent=1 // pred_check
      _
    $region39: #{tpu_custom_call.1} parent=1 // pred_check_branch
      %97 = sbr.rel (0) target = $region41
    $region40: #{tpu_custom_call.1} parent=1 // pred_region
      _
    $region41: #{tpu_custom_call.1} parent=1 // pred_fallthru
      _
    // Predicated region
    $region42: #{tpu_custom_call.1} parent=1 // pred_check
      _
    $region43: #{tpu_custom_call.1} parent=1 // pred_check_branch
      %99 = sbr.rel (0) target = $region45
    $region44: #{tpu_custom_call.1} parent=1 // pred_region
      _
    $region45: #{tpu_custom_call.1} parent=1 // pred_fallthru
      _
    // Predicated region
    $region46: #{tpu_custom_call.1} parent=1 // pred_check
      _
    $region47: #{tpu_custom_call.1} parent=1 // pred_check_branch
      %101 = sbr.rel (0) target = $region49
    $region48: #{tpu_custom_call.1} parent=1 // pred_region
      _
    $region49: #{tpu_custom_call.1} parent=1 // pred_fallthru
      _
    // Predicated region
    $region50: #{tpu_custom_call.1} parent=1 // pred_check
      _
    $region51: #{tpu_custom_call.1} parent=1 // pred_check_branch
      %103 = sbr.rel (0) target = $region53
    $region52: #{tpu_custom_call.1} parent=1 // pred_region
      _
    $region53: #{tpu_custom_call.1} parent=1 // pred_fallthru
      _
    // Predicated region
    $region54: #{tpu_custom_call.1} parent=1 // pred_check
      _
    $region55: #{tpu_custom_call.1} parent=1 // pred_check_branch
      %105 = sbr.rel (0) target = $region57
    $region56: #{tpu_custom_call.1} parent=1 // pred_region
      %106 = dma.done [#allocation4], 128
    $region57: #{tpu_custom_call.1} parent=1 // pred_fallthru
      _
    // Predicated region
    $region58: #{tpu_custom_call.1} parent=1 // pred_check
      _
    $region59: #{tpu_custom_call.1} parent=1 // pred_check_branch
      %108 = sbr.rel (0) target = $region61
    $region60: #{tpu_custom_call.1} parent=1 // pred_region
      %109 = dma.done [#allocation7], 128
    $region61: #{tpu_custom_call.1} parent=1 // pred_fallthru
      _
    // Predicated region
    $region62: #{tpu_custom_call.1} parent=1 // pred_check
      _
    $region63: #{tpu_custom_call.1} parent=1 // pred_check_branch
      %111 = sbr.rel (0) target = $region65
    $region64: #{tpu_custom_call.1} parent=1 // pred_region
      %112 = dma.done [#allocation7], 512
    $region65: #{tpu_custom_call.1} parent=1 // pred_fallthru
      _
    // Predicated region
    $region66: #{tpu_custom_call.1} parent=1 // pred_check
      _
    $region67: #{tpu_custom_call.1} parent=1 // pred_check_branch
      %114 = sbr.rel (0) target = $region69
    $region68: #{tpu_custom_call.1} parent=1 // pred_region
      %115 = dma.done [#allocation10], 768
    $region69: #{tpu_custom_call.1} parent=1 // pred_fallthru
      _
    // Predicated region
    $region70: #{tpu_custom_call.1} parent=1 // pred_check
      _
    $region71: #{tpu_custom_call.1} parent=1 // pred_check_branch
      %117 = sbr.rel (0) target = $region73
    $region72: #{tpu_custom_call.1} parent=1 // pred_region
      %118 = dma.done [#allocation10], 512
    $region73: #{tpu_custom_call.1} parent=1 // pred_fallthru
      _
    %v119 = vld [vmem:[%s8] sm:$0x1]
    %v120 = vld [vmem:[%s9] sm:$0x1]
    %v121 = vlaneseq
    %v122 = vand.u32 %v121, 127
    %v123 = vld [vmem:[#allocation3] sm:$0x3]
    %v124 = vld [vmem:[#allocation8] sm:$0xff]
    %v125 = vld [vmem:[#allocation8 + $0x8] sm:$0xff]
    %v126 = vld [vmem:[#allocation8 + $0x10] sm:$0xff]
    %v127 = vld [vmem:[#allocation8 + $0x18] sm:$0xff]
    %v128 = vld [vmem:[%s3] sm:$0x1]
    %v130 = vlaneseq
    %v131 = vshrl.u32 %v130, 7
    %v132 = vsub.s32 0, %v131
    %v133 = vrot.slane %v128, %v132
    %vm135 = vcmask 261120
    %v137 = vsel %vm135, %v123, 0
    %139 = vmatprep.subr.mxu0 0.0
    %140 = vmatpush1.msra.mxu0 0.0
    %141 = vmatprep.subr.mxu0 0.0
    %142 = vmatpush1.msra.mxu0 0.0
    %143 = vmatprep.subr.mxu0 0.0
    %144 = vmatpush1.msra.mxu0 0.0
    %145 = vmatprep.subr.mxu0 0.0
    %146 = vmatpush1.msra.mxu0 0.0
    %147 = vmatprep.subr.mxu0 0.0
    %148 = vmatpush1.msra.mxu0 0.0
    %149 = vmatprep.subr.mxu0 0.0
    %150 = vmatpush1.msra.mxu0 0.0
    %151 = vmatprep.subr.mxu0 0.0
    %152 = vmatpush1.msra.mxu0 0.0
    %153 = vmatprep.subr.mxu0 0.0
    %154 = vmatpush1.msra.mxu0 0.0
    %155 = vmatprep.subr.mxu0 0.0
    %156 = vmatpush1.msra.mxu0 0.0
    %157 = vmatprep.subr.mxu0 0.0
    %158 = vmatpush1.msra.mxu0 0.0
    %159 = vmatprep.subr.mxu0 0.0
    %160 = vmatpush1.msra.mxu0 0.0
    %161 = vmatprep.subr.mxu0 0.0
    %162 = vmatpush1.msra.mxu0 0.0
    %163 = vmatprep.subr.mxu0 0.0
    %164 = vmatpush1.msra.mxu0 %v127
    %165 = vmatprep.subr.mxu0 0.0
    %166 = vmatpush1.msra.mxu0 %v126
    %167 = vmatprep.subr.mxu0 0.0
    %168 = vmatpush1.msra.mxu0 %v125
    %169 = vmatprep.subr.mxu0 0.0
    %170 = vmatpush1.msra.mxu0 %v124
    %171 = vmatprep.subr.mxu0 0.0
    %172 = vmatpush2.msra.mxu0 0.0
    %173 = vmatprep.subr.mxu0 0.0
    %174 = vmatpush2.msra.mxu0 0.0
    %175 = vmatprep.subr.mxu0 0.0
    %176 = vmatpush2.msra.mxu0 0.0
    %177 = vmatprep.subr.mxu0 0.0
    %178 = vmatpush2.msra.mxu0 0.0
    %179 = vmatprep.subr.mxu0 0.0
    %180 = vmatpush2.msra.mxu0 0.0
    %181 = vmatprep.subr.mxu0 0.0
    %182 = vmatpush2.msra.mxu0 0.0
    %183 = vmatprep.subr.mxu0 0.0
    %184 = vmatpush2.msra.mxu0 0.0
    %185 = vmatprep.subr.mxu0 0.0
    %186 = vmatpush2.msra.mxu0 0.0
    %187 = vmatprep.subr.mxu0 0.0
    %188 = vmatpush2.msra.mxu0 0.0
    %189 = vmatprep.subr.mxu0 0.0
    %190 = vmatpush2.msra.mxu0 0.0
    %191 = vmatprep.subr.mxu0 0.0
    %192 = vmatpush2.msra.mxu0 0.0
    %193 = vmatprep.subr.mxu0 0.0
    %194 = vmatpush2.msra.mxu0 0.0
    %195 = vmatprep.subr.mxu0 0.0
    %196 = vmatpush2.msra.mxu0 0.0
    %197 = vmatprep.subr.mxu0 0.0
    %198 = vmatpush2.msra.mxu0 0.0
    %199 = vmatprep.subr.mxu0 0.0
    %200 = vmatpush2.msra.mxu0 0.0
    %201 = vmatprep.subr.mxu0 0.0
    %202 = vmatpush2.msra.mxu0 0.0
    %203 = vmatprep.mubr.f32.mxu0 0.0
    %204 = vmatmul.mubr.f32.gmra.mxu0 %v137
    %v205 = vpop.f32.mrf.mxu0
    %v206 = vadd.f32 %v133, %v205
    %v207 = vpop.f32.mrf.mxu0
    %208 = vdwg.mxu0
    %v209 = vtanh.pop %v206
    %v210 = vld [vmem:[#allocation6] sm:$0x3]
    %v211 = vld [vmem:[#allocation9] sm:$0xff]
    %v212 = vld [vmem:[#allocation9 + $0x8] sm:$0xff]
    %v213 = vld [vmem:[#allocation9 + $0x10] sm:$0xff]
    %v214 = vld [vmem:[#allocation9 + $0x18] sm:$0xff]
    %v215 = vld [vmem:[#allocation9 + $0x20] sm:$0xff]
    %v216 = vld [vmem:[#allocation9 + $0x28] sm:$0xff]
    %v217 = vld [vmem:[%s5] sm:$0x1]
    %v219 = vlaneseq
    %v220 = vshrl.u32 %v219, 7
    %v221 = vsub.s32 0, %v220
    %v222 = vrot.slane %v217, %v221
    %vm224 = vcmask 392192
    %v226 = vsel %vm224, %v210, 0
    %228 = vmatprep.subr.mxu0 0.0
    %229 = vmatpush1.msra.mxu0 0.0
    %230 = vmatprep.subr.mxu0 0.0
    %231 = vmatpush1.msra.mxu0 0.0
    %232 = vmatprep.subr.mxu0 0.0
    %233 = vmatpush1.msra.mxu0 0.0
    %234 = vmatprep.subr.mxu0 0.0
    %235 = vmatpush1.msra.mxu0 0.0
    %236 = vmatprep.subr.mxu0 0.0
    %237 = vmatpush1.msra.mxu0 0.0
    %238 = vmatprep.subr.mxu0 0.0
    %239 = vmatpush1.msra.mxu0 0.0
    %240 = vmatprep.subr.mxu0 0.0
    %241 = vmatpush1.msra.mxu0 0.0
    %242 = vmatprep.subr.mxu0 0.0
    %243 = vmatpush1.msra.mxu0 0.0
    %244 = vmatprep.subr.mxu0 0.0
    %245 = vmatpush1.msra.mxu0 0.0
    %246 = vmatprep.subr.mxu0 0.0
    %247 = vmatpush1.msra.mxu0 0.0
    %248 = vmatprep.subr.mxu0 0.0
    %249 = vmatpush1.msra.mxu0 %v216
    %250 = vmatprep.subr.mxu0 0.0
    %251 = vmatpush1.msra.mxu0 %v215
    %252 = vmatprep.subr.mxu0 0.0
    %253 = vmatpush1.msra.mxu0 %v214
    %254 = vmatprep.subr.mxu0 0.0
    %255 = vmatpush1.msra.mxu0 %v213
    %256 = vmatprep.subr.mxu0 0.0
    %257 = vmatpush1.msra.mxu0 %v212
    %258 = vmatprep.subr.mxu0 0.0
    %259 = vmatpush1.msra.mxu0 %v211
    %260 = vmatprep.subr.mxu0 0.0
    %261 = vmatpush2.msra.mxu0 0.0
    %262 = vmatprep.subr.mxu0 0.0
    %263 = vmatpush2.msra.mxu0 0.0
    %264 = vmatprep.subr.mxu0 0.0
    %265 = vmatpush2.msra.mxu0 0.0
    %266 = vmatprep.subr.mxu0 0.0
    %267 = vmatpush2.msra.mxu0 0.0
    %268 = vmatprep.subr.mxu0 0.0
    %269 = vmatpush2.msra.mxu0 0.0
    %270 = vmatprep.subr.mxu0 0.0
    %271 = vmatpush2.msra.mxu0 0.0
    %272 = vmatprep.subr.mxu0 0.0
    %273 = vmatpush2.msra.mxu0 0.0
    %274 = vmatprep.subr.mxu0 0.0
    %275 = vmatpush2.msra.mxu0 0.0
    %276 = vmatprep.subr.mxu0 0.0
    %277 = vmatpush2.msra.mxu0 0.0
    %278 = vmatprep.subr.mxu0 0.0
    %279 = vmatpush2.msra.mxu0 0.0
    %280 = vmatprep.subr.mxu0 0.0
    %281 = vmatpush2.msra.mxu0 0.0
    %282 = vmatprep.subr.mxu0 0.0
    %283 = vmatpush2.msra.mxu0 0.0
    %284 = vmatprep.subr.mxu0 0.0
    %285 = vmatpush2.msra.mxu0 0.0
    %286 = vmatprep.subr.mxu0 0.0
    %287 = vmatpush2.msra.mxu0 0.0
    %288 = vmatprep.subr.mxu0 0.0
    %289 = vmatpush2.msra.mxu0 0.0
    %290 = vmatprep.subr.mxu0 0.0
    %291 = vmatpush2.msra.mxu0 0.0
    %292 = vmatprep.mubr.f32.mxu0 0.0
    %293 = vmatmul.mubr.f32.gmra.mxu0 %v226
    %v294 = vpop.f32.mrf.mxu0
    %v295 = vadd.f32 %v222, %v294
    %v296 = vpop.f32.mrf.mxu0
    %297 = vdwg.mxu0
    %v298 = vtanh.pop %v295
    %v299 = vld [vmem:[#allocation11] sm:$0xff]
    %v300 = vld [vmem:[#allocation11 + $0x8] sm:$0xff]
    %v301 = vld [vmem:[#allocation11 + $0x10] sm:$0xff]
    %v302 = vld [vmem:[#allocation11 + $0x18] sm:$0xff]
    %v303 = vld [vmem:[%s7] sm:$0x1]
    %v305 = vlaneseq
    %v306 = vshrl.u32 %v305, 7
    %v307 = vsub.s32 0, %v306
    %v308 = vrot.slane %v303, %v307
    %v311 = vsel %vm135, %v209, 0
    %313 = vmatprep.subr.mxu0 0.0
    %314 = vmatpush1.msra.mxu0 0.0
    %315 = vmatprep.subr.mxu0 0.0
    %316 = vmatpush1.msra.mxu0 0.0
    %317 = vmatprep.subr.mxu0 0.0
    %318 = vmatpush1.msra.mxu0 0.0
    %319 = vmatprep.subr.mxu0 0.0
    %320 = vmatpush1.msra.mxu0 0.0
    %321 = vmatprep.subr.mxu0 0.0
    %322 = vmatpush1.msra.mxu0 0.0
    %323 = vmatprep.subr.mxu0 0.0
    %324 = vmatpush1.msra.mxu0 0.0
    %325 = vmatprep.subr.mxu0 0.0
    %326 = vmatpush1.msra.mxu0 0.0
    %327 = vmatprep.subr.mxu0 0.0
    %328 = vmatpush1.msra.mxu0 0.0
    %329 = vmatprep.subr.mxu0 0.0
    %330 = vmatpush1.msra.mxu0 0.0
    %331 = vmatprep.subr.mxu0 0.0
    %332 = vmatpush1.msra.mxu0 0.0
    %333 = vmatprep.subr.mxu0 0.0
    %334 = vmatpush1.msra.mxu0 0.0
    %335 = vmatprep.subr.mxu0 0.0
    %336 = vmatpush1.msra.mxu0 0.0
    %337 = vmatprep.subr.mxu0 0.0
    %338 = vmatpush1.msra.mxu0 %v302
    %339 = vmatprep.subr.mxu0 0.0
    %340 = vmatpush1.msra.mxu0 %v301
    %341 = vmatprep.subr.mxu0 0.0
    %342 = vmatpush1.msra.mxu0 %v300
    %343 = vmatprep.subr.mxu0 0.0
    %344 = vmatpush1.msra.mxu0 %v299
    %345 = vmatprep.subr.mxu0 0.0
    %346 = vmatpush2.msra.mxu0 0.0
    %347 = vmatprep.subr.mxu0 0.0
    %348 = vmatpush2.msra.mxu0 0.0
    %349 = vmatprep.subr.mxu0 0.0
    %350 = vmatpush2.msra.mxu0 0.0
    %351 = vmatprep.subr.mxu0 0.0
    %352 = vmatpush2.msra.mxu0 0.0
    %353 = vmatprep.subr.mxu0 0.0
    %354 = vmatpush2.msra.mxu0 0.0
    %355 = vmatprep.subr.mxu0 0.0
    %356 = vmatpush2.msra.mxu0 0.0
    %357 = vmatprep.subr.mxu0 0.0
    %358 = vmatpush2.msra.mxu0 0.0
    %359 = vmatprep.subr.mxu0 0.0
    %360 = vmatpush2.msra.mxu0 0.0
    %361 = vmatprep.subr.mxu0 0.0
    %362 = vmatpush2.msra.mxu0 0.0
    %363 = vmatprep.subr.mxu0 0.0
    %364 = vmatpush2.msra.mxu0 0.0
    %365 = vmatprep.subr.mxu0 0.0
    %366 = vmatpush2.msra.mxu0 0.0
    %367 = vmatprep.subr.mxu0 0.0
    %368 = vmatpush2.msra.mxu0 0.0
    %369 = vmatprep.subr.mxu0 0.0
    %370 = vmatpush2.msra.mxu0 0.0
    %371 = vmatprep.subr.mxu0 0.0
    %372 = vmatpush2.msra.mxu0 0.0
    %373 = vmatprep.subr.mxu0 0.0
    %374 = vmatpush2.msra.mxu0 0.0
    %375 = vmatprep.subr.mxu0 0.0
    %376 = vmatpush2.msra.mxu0 0.0
    %377 = vmatprep.mubr.f32.mxu0 0.0
    %378 = vmatmul.mubr.f32.gmra.mxu0 %v311
    %v379 = vpop.f32.mrf.mxu0
    %v380 = vadd.f32 %v308, %v379
    %v381 = vpop.f32.mrf.mxu0
    %382 = vdwg.mxu0
    %vm383 = vcmask 386048
    %v384 = vsel %vm383, %v380, 0.0
    %385 = vadd.xlane.f32.xlu0 %v384
    %v386 = vpop.xlane.xlu0 %385
    %v387 = vrcp.pop 48.0
    %v388 = vmul.f32 %v386, %v387
    %v389 = vsub.f32 %v380, %v388
    %v390 = vmul.f32 %v389, %v389
    %v391 = vsel %vm383, %v390, 0.0
    %392 = vadd.xlane.f32.xlu0 %v391
    %v393 = vpop.xlane.xlu0 %392
    %v394 = vmul.f32 %v393, %v387
    %v395 = vadd.f32 %v394, 1e-05
    %v396 = vrsqrt.pop %v395
    %v397 = vmul.f32 %v389, %v396
    %v399 = vlaneseq
    %v400 = vshrl.u32 %v399, 7
    %v401 = vsub.s32 0, %v400
    %v402 = vrot.slane %v119, %v401
    %v404 = vmul.f32 %v397, %v402
    %v406 = vlaneseq
    %v407 = vshrl.u32 %v406, 7
    %v408 = vsub.s32 0, %v407
    %v409 = vrot.slane %v120, %v408
    %v411 = vadd.f32 %v404, %v409
    %v412 = vsel %vm383, %v298, 0.0
    %413 = vadd.xlane.f32.xlu0 %v412
    %v414 = vpop.xlane.xlu0 %413
    %v415 = vmul.f32 %v414, %v387
    %v416 = vsub.f32 %v298, %v415
    %v417 = vmul.f32 %v416, %v416
    %v418 = vsel %vm383, %v417, 0.0
    %419 = vadd.xlane.f32.xlu0 %v418
    %v420 = vpop.xlane.xlu0 %419
    %v421 = vmul.f32 %v420, %v387
    %v422 = vadd.f32 %v421, 1e-05
    %v423 = vrsqrt.pop %v422
    %v424 = vmul.f32 %v416, %v423
    %v425 = vmul.f32 %v424, %v402
    %v426 = vadd.f32 %v425, %v409
    %v427 = vld [vmem:[%s10] sm:$0x1]
    %v429 = vlaneseq
    %v430 = vshrl.u32 %v429, 7
    %v431 = vsub.s32 0, %v430
    %v432 = vrot.slane %v427, %v431
    %v434 = vmul.f32 %v411, %v432
    %v435 = vsel %vm383, %v434, 0.0
    %436 = vadd.xlane.f32.xlu0 %v435
    %v437 = vpop.xlane.xlu0 %436
    %v438 = vld [vmem:[%s11] sm:$0x1]
    %v440 = vlaneseq
    %v441 = vshrl.u32 %v440, 7
    %v442 = vsub.s32 0, %v441
    %v443 = vrot.slane %v438, %v442
    %v445 = vmul.f32 %v426, %v443
    %v446 = vsel %vm383, %v445, 0.0
    %447 = vadd.xlane.f32.xlu0 %v446
    %v448 = vpop.xlane.xlu0 %447
    %v449 = vadd.f32 %v437, %v448
    %v450 = vld [vmem:[#allocation2] sm:$0x1]
    %v452 = vlaneseq
    %v453 = vshrl.u32 %v452, 7
    %v454 = vsub.s32 0, %v453
    %v455 = vrot.slane %v450, %v454
    %v457 = vadd.f32 %v449, %v455
    %vm458 = vcmp.eq.s32.totalorder %v122, 0
    %460 = vset.pattern.permute.xlu0 0
    %461 = vperm.xlu0 %460, %v457
    %v462 = vpop.permute.xlu0 %461
    %v464 = vsel %vm458, %v462, 0.0
    %v465 = vadd.f32 %v464, 0.0
    %s466 = scalar_lea.vmem [#allocation3], 2
    %v467 = vld [vmem:[%s466] sm:$0x3]
    %v469 = vsel %vm135, %v467, 0
    %471 = vmatprep.subr.mxu0 0.0
    %472 = vmatpush1.msra.mxu0 0.0
    %473 = vmatprep.subr.mxu0 0.0
    %474 = vmatpush1.msra.mxu0 0.0
    %475 = vmatprep.subr.mxu0 0.0
    %476 = vmatpush1.msra.mxu0 0.0
    %477 = vmatprep.subr.mxu0 0.0
    %478 = vmatpush1.msra.mxu0 0.0
    %479 = vmatprep.subr.mxu0 0.0
    %480 = vmatpush1.msra.mxu0 0.0
    %481 = vmatprep.subr.mxu0 0.0
    %482 = vmatpush1.msra.mxu0 0.0
    %483 = vmatprep.subr.mxu0 0.0
    %484 = vmatpush1.msra.mxu0 0.0
    %485 = vmatprep.subr.mxu0 0.0
    %486 = vmatpush1.msra.mxu0 0.0
    %487 = vmatprep.subr.mxu0 0.0
    %488 = vmatpush1.msra.mxu0 0.0
    %489 = vmatprep.subr.mxu0 0.0
    %490 = vmatpush1.msra.mxu0 0.0
    %491 = vmatprep.subr.mxu0 0.0
    %492 = vmatpush1.msra.mxu0 0.0
    %493 = vmatprep.subr.mxu0 0.0
    %494 = vmatpush1.msra.mxu0 0.0
    %495 = vmatprep.subr.mxu0 0.0
    %496 = vmatpush1.msra.mxu0 %v127
    %497 = vmatprep.subr.mxu0 0.0
    %498 = vmatpush1.msra.mxu0 %v126
    %499 = vmatprep.subr.mxu0 0.0
    %500 = vmatpush1.msra.mxu0 %v125
    %501 = vmatprep.subr.mxu0 0.0
    %502 = vmatpush1.msra.mxu0 %v124
    %503 = vmatprep.subr.mxu0 0.0
    %504 = vmatpush2.msra.mxu0 0.0
    %505 = vmatprep.subr.mxu0 0.0
    %506 = vmatpush2.msra.mxu0 0.0
    %507 = vmatprep.subr.mxu0 0.0
    %508 = vmatpush2.msra.mxu0 0.0
    %509 = vmatprep.subr.mxu0 0.0
    %510 = vmatpush2.msra.mxu0 0.0
    %511 = vmatprep.subr.mxu0 0.0
    %512 = vmatpush2.msra.mxu0 0.0
    %513 = vmatprep.subr.mxu0 0.0
    %514 = vmatpush2.msra.mxu0 0.0
    %515 = vmatprep.subr.mxu0 0.0
    %516 = vmatpush2.msra.mxu0 0.0
    %517 = vmatprep.subr.mxu0 0.0
    %518 = vmatpush2.msra.mxu0 0.0
    %519 = vmatprep.subr.mxu0 0.0
    %520 = vmatpush2.msra.mxu0 0.0
    %521 = vmatprep.subr.mxu0 0.0
    %522 = vmatpush2.msra.mxu0 0.0
    %523 = vmatprep.subr.mxu0 0.0
    %524 = vmatpush2.msra.mxu0 0.0
    %525 = vmatprep.subr.mxu0 0.0
    %526 = vmatpush2.msra.mxu0 0.0
    %527 = vmatprep.subr.mxu0 0.0
    %528 = vmatpush2.msra.mxu0 0.0
    %529 = vmatprep.subr.mxu0 0.0
    %530 = vmatpush2.msra.mxu0 0.0
    %531 = vmatprep.subr.mxu0 0.0
    %532 = vmatpush2.msra.mxu0 0.0
    %533 = vmatprep.subr.mxu0 0.0
    %534 = vmatpush2.msra.mxu0 0.0
    %535 = vmatprep.mubr.f32.mxu0 0.0
    %536 = vmatmul.mubr.f32.gmra.mxu0 %v469
    %v537 = vpop.f32.mrf.mxu0
    %v538 = vadd.f32 %v133, %v537
    %v539 = vpop.f32.mrf.mxu0
    %540 = vdwg.mxu0
    %v541 = vtanh.pop %v538
    %s542 = scalar_lea.vmem [#allocation6], 2
    %v543 = vld [vmem:[%s542] sm:$0x3]
    %v545 = vsel %vm224, %v543, 0
    %547 = vmatprep.subr.mxu0 0.0
    %548 = vmatpush1.msra.mxu0 0.0
    %549 = vmatprep.subr.mxu0 0.0
    %550 = vmatpush1.msra.mxu0 0.0
    %551 = vmatprep.subr.mxu0 0.0
    %552 = vmatpush1.msra.mxu0 0.0
    %553 = vmatprep.subr.mxu0 0.0
    %554 = vmatpush1.msra.mxu0 0.0
    %555 = vmatprep.subr.mxu0 0.0
    %556 = vmatpush1.msra.mxu0 0.0
    %557 = vmatprep.subr.mxu0 0.0
    %558 = vmatpush1.msra.mxu0 0.0
    %559 = vmatprep.subr.mxu0 0.0
    %560 = vmatpush1.msra.mxu0 0.0
    %561 = vmatprep.subr.mxu0 0.0
    %562 = vmatpush1.msra.mxu0 0.0
    %563 = vmatprep.subr.mxu0 0.0
    %564 = vmatpush1.msra.mxu0 0.0
    %565 = vmatprep.subr.mxu0 0.0
    %566 = vmatpush1.msra.mxu0 0.0
    %567 = vmatprep.subr.mxu0 0.0
    %568 = vmatpush1.msra.mxu0 %v216
    %569 = vmatprep.subr.mxu0 0.0
    %570 = vmatpush1.msra.mxu0 %v215
    %571 = vmatprep.subr.mxu0 0.0
    %572 = vmatpush1.msra.mxu0 %v214
    %573 = vmatprep.subr.mxu0 0.0
    %574 = vmatpush1.msra.mxu0 %v213
    %575 = vmatprep.subr.mxu0 0.0
    %576 = vmatpush1.msra.mxu0 %v212
    %577 = vmatprep.subr.mxu0 0.0
    %578 = vmatpush1.msra.mxu0 %v211
    %579 = vmatprep.subr.mxu0 0.0
    %580 = vmatpush2.msra.mxu0 0.0
    %581 = vmatprep.subr.mxu0 0.0
    %582 = vmatpush2.msra.mxu0 0.0
    %583 = vmatprep.subr.mxu0 0.0
    %584 = vmatpush2.msra.mxu0 0.0
    %585 = vmatprep.subr.mxu0 0.0
    %586 = vmatpush2.msra.mxu0 0.0
    %587 = vmatprep.subr.mxu0 0.0
    %588 = vmatpush2.msra.mxu0 0.0
    %589 = vmatprep.subr.mxu0 0.0
    %590 = vmatpush2.msra.mxu0 0.0
    %591 = vmatprep.subr.mxu0 0.0
    %592 = vmatpush2.msra.mxu0 0.0
    %593 = vmatprep.subr.mxu0 0.0
    %594 = vmatpush2.msra.mxu0 0.0
    %595 = vmatprep.subr.mxu0 0.0
    %596 = vmatpush2.msra.mxu0 0.0
    %597 = vmatprep.subr.mxu0 0.0
    %598 = vmatpush2.msra.mxu0 0.0
    %599 = vmatprep.subr.mxu0 0.0
    %600 = vmatpush2.msra.mxu0 0.0
    %601 = vmatprep.subr.mxu0 0.0
    %602 = vmatpush2.msra.mxu0 0.0
    %603 = vmatprep.subr.mxu0 0.0
    %604 = vmatpush2.msra.mxu0 0.0
    %605 = vmatprep.subr.mxu0 0.0
    %606 = vmatpush2.msra.mxu0 0.0
    %607 = vmatprep.subr.mxu0 0.0
    %608 = vmatpush2.msra.mxu0 0.0
    %609 = vmatprep.subr.mxu0 0.0
    %610 = vmatpush2.msra.mxu0 0.0
    %611 = vmatprep.mubr.f32.mxu0 0.0
    %612 = vmatmul.mubr.f32.gmra.mxu0 %v545
    %v613 = vpop.f32.mrf.mxu0
    %v614 = vadd.f32 %v222, %v613
    %v615 = vpop.f32.mrf.mxu0
    %616 = vdwg.mxu0
    %v617 = vtanh.pop %v614
    %v619 = vsel %vm135, %v541, 0
    %621 = vmatprep.subr.mxu0 0.0
    %622 = vmatpush1.msra.mxu0 0.0
    %623 = vmatprep.subr.mxu0 0.0
    %624 = vmatpush1.msra.mxu0 0.0
    %625 = vmatprep.subr.mxu0 0.0
    %626 = vmatpush1.msra.mxu0 0.0
    %627 = vmatprep.subr.mxu0 0.0
    %628 = vmatpush1.msra.mxu0 0.0
    %629 = vmatprep.subr.mxu0 0.0
    %630 = vmatpush1.msra.mxu0 0.0
    %631 = vmatprep.subr.mxu0 0.0
    %632 = vmatpush1.msra.mxu0 0.0
    %633 = vmatprep.subr.mxu0 0.0
    %634 = vmatpush1.msra.mxu0 0.0
    %635 = vmatprep.subr.mxu0 0.0
    %636 = vmatpush1.msra.mxu0 0.0
    %637 = vmatprep.subr.mxu0 0.0
    %638 = vmatpush1.msra.mxu0 0.0
    %639 = vmatprep.subr.mxu0 0.0
    %640 = vmatpush1.msra.mxu0 0.0
    %641 = vmatprep.subr.mxu0 0.0
    %642 = vmatpush1.msra.mxu0 0.0
    %643 = vmatprep.subr.mxu0 0.0
    %644 = vmatpush1.msra.mxu0 0.0
    %645 = vmatprep.subr.mxu0 0.0
    %646 = vmatpush1.msra.mxu0 %v302
    %647 = vmatprep.subr.mxu0 0.0
    %648 = vmatpush1.msra.mxu0 %v301
    %649 = vmatprep.subr.mxu0 0.0
    %650 = vmatpush1.msra.mxu0 %v300
    %651 = vmatprep.subr.mxu0 0.0
    %652 = vmatpush1.msra.mxu0 %v299
    %653 = vmatprep.subr.mxu0 0.0
    %654 = vmatpush2.msra.mxu0 0.0
    %655 = vmatprep.subr.mxu0 0.0
    %656 = vmatpush2.msra.mxu0 0.0
    %657 = vmatprep.subr.mxu0 0.0
    %658 = vmatpush2.msra.mxu0 0.0
    %659 = vmatprep.subr.mxu0 0.0
    %660 = vmatpush2.msra.mxu0 0.0
    %661 = vmatprep.subr.mxu0 0.0
    %662 = vmatpush2.msra.mxu0 0.0
    %663 = vmatprep.subr.mxu0 0.0
    %664 = vmatpush2.msra.mxu0 0.0
    %665 = vmatprep.subr.mxu0 0.0
    %666 = vmatpush2.msra.mxu0 0.0
    %667 = vmatprep.subr.mxu0 0.0
    %668 = vmatpush2.msra.mxu0 0.0
    %669 = vmatprep.subr.mxu0 0.0
    %670 = vmatpush2.msra.mxu0 0.0
    %671 = vmatprep.subr.mxu0 0.0
    %672 = vmatpush2.msra.mxu0 0.0
    %673 = vmatprep.subr.mxu0 0.0
    %674 = vmatpush2.msra.mxu0 0.0
    %675 = vmatprep.subr.mxu0 0.0
    %676 = vmatpush2.msra.mxu0 0.0
    %677 = vmatprep.subr.mxu0 0.0
    %678 = vmatpush2.msra.mxu0 0.0
    %679 = vmatprep.subr.mxu0 0.0
    %680 = vmatpush2.msra.mxu0 0.0
    %681 = vmatprep.subr.mxu0 0.0
    %682 = vmatpush2.msra.mxu0 0.0
    %683 = vmatprep.subr.mxu0 0.0
    %684 = vmatpush2.msra.mxu0 0.0
    %685 = vmatprep.mubr.f32.mxu0 0.0
    %686 = vmatmul.mubr.f32.gmra.mxu0 %v619
    %v687 = vpop.f32.mrf.mxu0
    %v688 = vadd.f32 %v308, %v687
    %v689 = vpop.f32.mrf.mxu0
    %690 = vdwg.mxu0
    %v691 = vsel %vm383, %v688, 0.0
    %692 = vadd.xlane.f32.xlu0 %v691
    %v693 = vpop.xlane.xlu0 %692
    %v694 = vmul.f32 %v693, %v387
    %v695 = vsub.f32 %v688, %v694
    %v696 = vmul.f32 %v695, %v695
    %v697 = vsel %vm383, %v696, 0.0
    %698 = vadd.xlane.f32.xlu0 %v697
    %v699 = vpop.xlane.xlu0 %698
    %v700 = vmul.f32 %v699, %v387
    %v701 = vadd.f32 %v700, 1e-05
    %v702 = vrsqrt.pop %v701
    %v703 = vmul.f32 %v695, %v702
    %v704 = vmul.f32 %v703, %v402
    %v705 = vadd.f32 %v704, %v409
    %v706 = vsel %vm383, %v617, 0.0
    %707 = vadd.xlane.f32.xlu0 %v706
    %v708 = vpop.xlane.xlu0 %707
    %v709 = vmul.f32 %v708, %v387
    %v710 = vsub.f32 %v617, %v709
    %v711 = vmul.f32 %v710, %v710
    %v712 = vsel %vm383, %v711, 0.0
    %713 = vadd.xlane.f32.xlu0 %v712
    %v714 = vpop.xlane.xlu0 %713
    %v715 = vmul.f32 %v714, %v387
    %v716 = vadd.f32 %v715, 1e-05
    %v717 = vrsqrt.pop %v716
    %v718 = vmul.f32 %v710, %v717
    %v719 = vmul.f32 %v718, %v402
    %v720 = vadd.f32 %v719, %v409
    %v721 = vmul.f32 %v705, %v432
    %v722 = vsel %vm383, %v721, 0.0
    %723 = vadd.xlane.f32.xlu0 %v722
    %v724 = vpop.xlane.xlu0 %723
    %v725 = vmul.f32 %v720, %v443
    %v726 = vsel %vm383, %v725, 0.0
    %727 = vadd.xlane.f32.xlu0 %v726
    %v728 = vpop.xlane.xlu0 %727
    %v729 = vadd.f32 %v724, %v728
    %v730 = vadd.f32 %v729, %v455
    %vm731 = vcmp.eq.s32.totalorder %v122, 1
    %733 = vset.pattern.permute.xlu0 0
    %734 = vperm.xlu0 %733, %v730
    %v735 = vpop.permute.xlu0 %734
    %v737 = vsel %vm731, %v735, 0.0
    %v738 = vadd.f32 %v465, %v737
    %s739 = scalar_lea.vmem [#allocation3], 4
    %v740 = vld [vmem:[%s739] sm:$0x3]
    %v742 = vsel %vm135, %v740, 0
    %744 = vmatprep.subr.mxu0 0.0
    %745 = vmatpush1.msra.mxu0 0.0
    %746 = vmatprep.subr.mxu0 0.0
    %747 = vmatpush1.msra.mxu0 0.0
    %748 = vmatprep.subr.mxu0 0.0
    %749 = vmatpush1.msra.mxu0 0.0
    %750 = vmatprep.subr.mxu0 0.0
    %751 = vmatpush1.msra.mxu0 0.0
    %752 = vmatprep.subr.mxu0 0.0
    %753 = vmatpush1.msra.mxu0 0.0
    %754 = vmatprep.subr.mxu0 0.0
    %755 = vmatpush1.msra.mxu0 0.0
    %756 = vmatprep.subr.mxu0 0.0
    %757 = vmatpush1.msra.mxu0 0.0
    %758 = vmatprep.subr.mxu0 0.0
    %759 = vmatpush1.msra.mxu0 0.0
    %760 = vmatprep.subr.mxu0 0.0
    %761 = vmatpush1.msra.mxu0 0.0
    %762 = vmatprep.subr.mxu0 0.0
    %763 = vmatpush1.msra.mxu0 0.0
    %764 = vmatprep.subr.mxu0 0.0
    %765 = vmatpush1.msra.mxu0 0.0
    %766 = vmatprep.subr.mxu0 0.0
    %767 = vmatpush1.msra.mxu0 0.0
    %768 = vmatprep.subr.mxu0 0.0
    %769 = vmatpush1.msra.mxu0 %v127
    %770 = vmatprep.subr.mxu0 0.0
    %771 = vmatpush1.msra.mxu0 %v126
    %772 = vmatprep.subr.mxu0 0.0
    %773 = vmatpush1.msra.mxu0 %v125
    %774 = vmatprep.subr.mxu0 0.0
    %775 = vmatpush1.msra.mxu0 %v124
    %776 = vmatprep.subr.mxu0 0.0
    %777 = vmatpush2.msra.mxu0 0.0
    %778 = vmatprep.subr.mxu0 0.0
    %779 = vmatpush2.msra.mxu0 0.0
    %780 = vmatprep.subr.mxu0 0.0
    %781 = vmatpush2.msra.mxu0 0.0
    %782 = vmatprep.subr.mxu0 0.0
    %783 = vmatpush2.msra.mxu0 0.0
    %784 = vmatprep.subr.mxu0 0.0
    %785 = vmatpush2.msra.mxu0 0.0
    %786 = vmatprep.subr.mxu0 0.0
    %787 = vmatpush2.msra.mxu0 0.0
    %788 = vmatprep.subr.mxu0 0.0
    %789 = vmatpush2.msra.mxu0 0.0
    %790 = vmatprep.subr.mxu0 0.0
    %791 = vmatpush2.msra.mxu0 0.0
    %792 = vmatprep.subr.mxu0 0.0
    %793 = vmatpush2.msra.mxu0 0.0
    %794 = vmatprep.subr.mxu0 0.0
    %795 = vmatpush2.msra.mxu0 0.0
    %796 = vmatprep.subr.mxu0 0.0
    %797 = vmatpush2.msra.mxu0 0.0
    %798 = vmatprep.subr.mxu0 0.0
    %799 = vmatpush2.msra.mxu0 0.0
    %800 = vmatprep.subr.mxu0 0.0
    %801 = vmatpush2.msra.mxu0 0.0
    %802 = vmatprep.subr.mxu0 0.0
    %803 = vmatpush2.msra.mxu0 0.0
    %804 = vmatprep.subr.mxu0 0.0
    %805 = vmatpush2.msra.mxu0 0.0
    %806 = vmatprep.subr.mxu0 0.0
    %807 = vmatpush2.msra.mxu0 0.0
    %808 = vmatprep.mubr.f32.mxu0 0.0
    %809 = vmatmul.mubr.f32.gmra.mxu0 %v742
    %v810 = vpop.f32.mrf.mxu0
    %v811 = vadd.f32 %v133, %v810
    %v812 = vpop.f32.mrf.mxu0
    %813 = vdwg.mxu0
    %v814 = vtanh.pop %v811
    %s815 = scalar_lea.vmem [#allocation6], 4
    %v816 = vld [vmem:[%s815] sm:$0x3]
    %v818 = vsel %vm224, %v816, 0
    %820 = vmatprep.subr.mxu0 0.0
    %821 = vmatpush1.msra.mxu0 0.0
    %822 = vmatprep.subr.mxu0 0.0
    %823 = vmatpush1.msra.mxu0 0.0
    %824 = vmatprep.subr.mxu0 0.0
    %825 = vmatpush1.msra.mxu0 0.0
    %826 = vmatprep.subr.mxu0 0.0
    %827 = vmatpush1.msra.mxu0 0.0
    %828 = vmatprep.subr.mxu0 0.0
    %829 = vmatpush1.msra.mxu0 0.0
    %830 = vmatprep.subr.mxu0 0.0
    %831 = vmatpush1.msra.mxu0 0.0
    %832 = vmatprep.subr.mxu0 0.0
    %833 = vmatpush1.msra.mxu0 0.0
    %834 = vmatprep.subr.mxu0 0.0
    %835 = vmatpush1.msra.mxu0 0.0
    %836 = vmatprep.subr.mxu0 0.0
    %837 = vmatpush1.msra.mxu0 0.0
    %838 = vmatprep.subr.mxu0 0.0
    %839 = vmatpush1.msra.mxu0 0.0
    %840 = vmatprep.subr.mxu0 0.0
    %841 = vmatpush1.msra.mxu0 %v216
    %842 = vmatprep.subr.mxu0 0.0
    %843 = vmatpush1.msra.mxu0 %v215
    %844 = vmatprep.subr.mxu0 0.0
    %845 = vmatpush1.msra.mxu0 %v214
    %846 = vmatprep.subr.mxu0 0.0
    %847 = vmatpush1.msra.mxu0 %v213
    %848 = vmatprep.subr.mxu0 0.0
    %849 = vmatpush1.msra.mxu0 %v212
    %850 = vmatprep.subr.mxu0 0.0
    %851 = vmatpush1.msra.mxu0 %v211
    %852 = vmatprep.subr.mxu0 0.0
    %853 = vmatpush2.msra.mxu0 0.0
    %854 = vmatprep.subr.mxu0 0.0
    %855 = vmatpush2.msra.mxu0 0.0
    %856 = vmatprep.subr.mxu0 0.0
    %857 = vmatpush2.msra.mxu0 0.0
    %858 = vmatprep.subr.mxu0 0.0
    %859 = vmatpush2.msra.mxu0 0.0
    %860 = vmatprep.subr.mxu0 0.0
    %861 = vmatpush2.msra.mxu0 0.0
    %862 = vmatprep.subr.mxu0 0.0
    %863 = vmatpush2.msra.mxu0 0.0
    %864 = vmatprep.subr.mxu0 0.0
    %865 = vmatpush2.msra.mxu0 0.0
    %866 = vmatprep.subr.mxu0 0.0
    %867 = vmatpush2.msra.mxu0 0.0
    %868 = vmatprep.subr.mxu0 0.0
    %869 = vmatpush2.msra.mxu0 0.0
    %870 = vmatprep.subr.mxu0 0.0
    %871 = vmatpush2.msra.mxu0 0.0
    %872 = vmatprep.subr.mxu0 0.0
    %873 = vmatpush2.msra.mxu0 0.0
    %874 = vmatprep.subr.mxu0 0.0
    %875 = vmatpush2.msra.mxu0 0.0
    %876 = vmatprep.subr.mxu0 0.0
    %877 = vmatpush2.msra.mxu0 0.0
    %878 = vmatprep.subr.mxu0 0.0
    %879 = vmatpush2.msra.mxu0 0.0
    %880 = vmatprep.subr.mxu0 0.0
    %881 = vmatpush2.msra.mxu0 0.0
    %882 = vmatprep.subr.mxu0 0.0
    %883 = vmatpush2.msra.mxu0 0.0
    %884 = vmatprep.mubr.f32.mxu0 0.0
    %885 = vmatmul.mubr.f32.gmra.mxu0 %v818
    %v886 = vpop.f32.mrf.mxu0
    %v887 = vadd.f32 %v222, %v886
    %v888 = vpop.f32.mrf.mxu0
    %889 = vdwg.mxu0
    %v890 = vtanh.pop %v887
    %v892 = vsel %vm135, %v814, 0
    %894 = vmatprep.subr.mxu0 0.0
    %895 = vmatpush1.msra.mxu0 0.0
    %896 = vmatprep.subr.mxu0 0.0
    %897 = vmatpush1.msra.mxu0 0.0
    %898 = vmatprep.subr.mxu0 0.0
    %899 = vmatpush1.msra.mxu0 0.0
    %900 = vmatprep.subr.mxu0 0.0
    %901 = vmatpush1.msra.mxu0 0.0
    %902 = vmatprep.subr.mxu0 0.0
    %903 = vmatpush1.msra.mxu0 0.0
    %904 = vmatprep.subr.mxu0 0.0
    %905 = vmatpush1.msra.mxu0 0.0
    %906 = vmatprep.subr.mxu0 0.0
    %907 = vmatpush1.msra.mxu0 0.0
    %908 = vmatprep.subr.mxu0 0.0
    %909 = vmatpush1.msra.mxu0 0.0
    %910 = vmatprep.subr.mxu0 0.0
    %911 = vmatpush1.msra.mxu0 0.0
    %912 = vmatprep.subr.mxu0 0.0
    %913 = vmatpush1.msra.mxu0 0.0
    %914 = vmatprep.subr.mxu0 0.0
    %915 = vmatpush1.msra.mxu0 0.0
    %916 = vmatprep.subr.mxu0 0.0
    %917 = vmatpush1.msra.mxu0 0.0
    %918 = vmatprep.subr.mxu0 0.0
    %919 = vmatpush1.msra.mxu0 %v302
    %920 = vmatprep.subr.mxu0 0.0
    %921 = vmatpush1.msra.mxu0 %v301
    %922 = vmatprep.subr.mxu0 0.0
    %923 = vmatpush1.msra.mxu0 %v300
    %924 = vmatprep.subr.mxu0 0.0
    %925 = vmatpush1.msra.mxu0 %v299
    %926 = vmatprep.subr.mxu0 0.0
    %927 = vmatpush2.msra.mxu0 0.0
    %928 = vmatprep.subr.mxu0 0.0
    %929 = vmatpush2.msra.mxu0 0.0
    %930 = vmatprep.subr.mxu0 0.0
    %931 = vmatpush2.msra.mxu0 0.0
    %932 = vmatprep.subr.mxu0 0.0
    %933 = vmatpush2.msra.mxu0 0.0
    %934 = vmatprep.subr.mxu0 0.0
    %935 = vmatpush2.msra.mxu0 0.0
    %936 = vmatprep.subr.mxu0 0.0
    %937 = vmatpush2.msra.mxu0 0.0
    %938 = vmatprep.subr.mxu0 0.0
    %939 = vmatpush2.msra.mxu0 0.0
    %940 = vmatprep.subr.mxu0 0.0
    %941 = vmatpush2.msra.mxu0 0.0
    %942 = vmatprep.subr.mxu0 0.0
    %943 = vmatpush2.msra.mxu0 0.0
    %944 = vmatprep.subr.mxu0 0.0
    %945 = vmatpush2.msra.mxu0 0.0
    %946 = vmatprep.subr.mxu0 0.0
    %947 = vmatpush2.msra.mxu0 0.0
    %948 = vmatprep.subr.mxu0 0.0
    %949 = vmatpush2.msra.mxu0 0.0
    %950 = vmatprep.subr.mxu0 0.0
    %951 = vmatpush2.msra.mxu0 0.0
    %952 = vmatprep.subr.mxu0 0.0
    %953 = vmatpush2.msra.mxu0 0.0
    %954 = vmatprep.subr.mxu0 0.0
    %955 = vmatpush2.msra.mxu0 0.0
    %956 = vmatprep.subr.mxu0 0.0
    %957 = vmatpush2.msra.mxu0 0.0
    %958 = vmatprep.mubr.f32.mxu0 0.0
    %959 = vmatmul.mubr.f32.gmra.mxu0 %v892
    %v960 = vpop.f32.mrf.mxu0
    %v961 = vadd.f32 %v308, %v960
    %v962 = vpop.f32.mrf.mxu0
    %963 = vdwg.mxu0
    %v964 = vsel %vm383, %v961, 0.0
    %965 = vadd.xlane.f32.xlu0 %v964
    %v966 = vpop.xlane.xlu0 %965
    %v967 = vmul.f32 %v966, %v387
    %v968 = vsub.f32 %v961, %v967
    %v969 = vmul.f32 %v968, %v968
    %v970 = vsel %vm383, %v969, 0.0
    %971 = vadd.xlane.f32.xlu0 %v970
    %v972 = vpop.xlane.xlu0 %971
    %v973 = vmul.f32 %v972, %v387
    %v974 = vadd.f32 %v973, 1e-05
    %v975 = vrsqrt.pop %v974
    %v976 = vmul.f32 %v968, %v975
    %v977 = vmul.f32 %v976, %v402
    %v978 = vadd.f32 %v977, %v409
    %v979 = vsel %vm383, %v890, 0.0
    %980 = vadd.xlane.f32.xlu0 %v979
    %v981 = vpop.xlane.xlu0 %980
    %v982 = vmul.f32 %v981, %v387
    %v983 = vsub.f32 %v890, %v982
    %v984 = vmul.f32 %v983, %v983
    %v985 = vsel %vm383, %v984, 0.0
    %986 = vadd.xlane.f32.xlu0 %v985
    %v987 = vpop.xlane.xlu0 %986
    %v988 = vmul.f32 %v987, %v387
    %v989 = vadd.f32 %v988, 1e-05
    %v990 = vrsqrt.pop %v989
    %v991 = vmul.f32 %v983, %v990
    %v992 = vmul.f32 %v991, %v402
    %v993 = vadd.f32 %v992, %v409
    %v994 = vmul.f32 %v978, %v432
    %v995 = vsel %vm383, %v994, 0.0
    %996 = vadd.xlane.f32.xlu0 %v995
    %v997 = vpop.xlane.xlu0 %996
    %v998 = vmul.f32 %v993, %v443
    %v999 = vsel %vm383, %v998, 0.0
    %1000 = vadd.xlane.f32.xlu0 %v999
    %v1001 = vpop.xlane.xlu0 %1000
    %v1002 = vadd.f32 %v997, %v1001
    %v1003 = vadd.f32 %v1002, %v455
    %vm1004 = vcmp.eq.s32.totalorder %v122, 2
    %1006 = vset.pattern.permute.xlu0 0
    %1007 = vperm.xlu0 %1006, %v1003
    %v1008 = vpop.permute.xlu0 %1007
    %v1010 = vsel %vm1004, %v1008, 0.0
    %v1011 = vadd.f32 %v738, %v1010
    %s1012 = scalar_lea.vmem [#allocation3], 6
    %v1013 = vld [vmem:[%s1012] sm:$0x3]
    %v1015 = vsel %vm135, %v1013, 0
    %1017 = vmatprep.subr.mxu0 0.0
    %1018 = vmatpush1.msra.mxu0 0.0
    %1019 = vmatprep.subr.mxu0 0.0
    %1020 = vmatpush1.msra.mxu0 0.0
    %1021 = vmatprep.subr.mxu0 0.0
    %1022 = vmatpush1.msra.mxu0 0.0
    %1023 = vmatprep.subr.mxu0 0.0
    %1024 = vmatpush1.msra.mxu0 0.0
    %1025 = vmatprep.subr.mxu0 0.0
    %1026 = vmatpush1.msra.mxu0 0.0
    %1027 = vmatprep.subr.mxu0 0.0
    %1028 = vmatpush1.msra.mxu0 0.0
    %1029 = vmatprep.subr.mxu0 0.0
    %1030 = vmatpush1.msra.mxu0 0.0
    %1031 = vmatprep.subr.mxu0 0.0
    %1032 = vmatpush1.msra.mxu0 0.0
    %1033 = vmatprep.subr.mxu0 0.0
    %1034 = vmatpush1.msra.mxu0 0.0
    %1035 = vmatprep.subr.mxu0 0.0
    %1036 = vmatpush1.msra.mxu0 0.0
    %1037 = vmatprep.subr.mxu0 0.0
    %1038 = vmatpush1.msra.mxu0 0.0
    %1039 = vmatprep.subr.mxu0 0.0
    %1040 = vmatpush1.msra.mxu0 0.0
    %1041 = vmatprep.subr.mxu0 0.0
    %1042 = vmatpush1.msra.mxu0 %v127
    %1043 = vmatprep.subr.mxu0 0.0
    %1044 = vmatpush1.msra.mxu0 %v126
    %1045 = vmatprep.subr.mxu0 0.0
    %1046 = vmatpush1.msra.mxu0 %v125
    %1047 = vmatprep.subr.mxu0 0.0
    %1048 = vmatpush1.msra.mxu0 %v124
    %1049 = vmatprep.subr.mxu0 0.0
    %1050 = vmatpush2.msra.mxu0 0.0
    %1051 = vmatprep.subr.mxu0 0.0
    %1052 = vmatpush2.msra.mxu0 0.0
    %1053 = vmatprep.subr.mxu0 0.0
    %1054 = vmatpush2.msra.mxu0 0.0
    %1055 = vmatprep.subr.mxu0 0.0
    %1056 = vmatpush2.msra.mxu0 0.0
    %1057 = vmatprep.subr.mxu0 0.0
    %1058 = vmatpush2.msra.mxu0 0.0
    %1059 = vmatprep.subr.mxu0 0.0
    %1060 = vmatpush2.msra.mxu0 0.0
    %1061 = vmatprep.subr.mxu0 0.0
    %1062 = vmatpush2.msra.mxu0 0.0
    %1063 = vmatprep.subr.mxu0 0.0
    %1064 = vmatpush2.msra.mxu0 0.0
    %1065 = vmatprep.subr.mxu0 0.0
    %1066 = vmatpush2.msra.mxu0 0.0
    %1067 = vmatprep.subr.mxu0 0.0
    %1068 = vmatpush2.msra.mxu0 0.0
    %1069 = vmatprep.subr.mxu0 0.0
    %1070 = vmatpush2.msra.mxu0 0.0
    %1071 = vmatprep.subr.mxu0 0.0
    %1072 = vmatpush2.msra.mxu0 0.0
    %1073 = vmatprep.subr.mxu0 0.0
    %1074 = vmatpush2.msra.mxu0 0.0
    %1075 = vmatprep.subr.mxu0 0.0
    %1076 = vmatpush2.msra.mxu0 0.0
    %1077 = vmatprep.subr.mxu0 0.0
    %1078 = vmatpush2.msra.mxu0 0.0
    %1079 = vmatprep.subr.mxu0 0.0
    %1080 = vmatpush2.msra.mxu0 0.0
    %1081 = vmatprep.mubr.f32.mxu0 0.0
    %1082 = vmatmul.mubr.f32.gmra.mxu0 %v1015
    %v1083 = vpop.f32.mrf.mxu0
    %v1084 = vadd.f32 %v133, %v1083
    %v1085 = vpop.f32.mrf.mxu0
    %1086 = vdwg.mxu0
    %v1087 = vtanh.pop %v1084
    %s1088 = scalar_lea.vmem [#allocation6], 6
    %v1089 = vld [vmem:[%s1088] sm:$0x3]
    %v1091 = vsel %vm224, %v1089, 0
    %1093 = vmatprep.subr.mxu0 0.0
    %1094 = vmatpush1.msra.mxu0 0.0
    %1095 = vmatprep.subr.mxu0 0.0
    %1096 = vmatpush1.msra.mxu0 0.0
    %1097 = vmatprep.subr.mxu0 0.0
    %1098 = vmatpush1.msra.mxu0 0.0
    %1099 = vmatprep.subr.mxu0 0.0
    %1100 = vmatpush1.msra.mxu0 0.0
    %1101 = vmatprep.subr.mxu0 0.0
    %1102 = vmatpush1.msra.mxu0 0.0
    %1103 = vmatprep.subr.mxu0 0.0
    %1104 = vmatpush1.msra.mxu0 0.0
    %1105 = vmatprep.subr.mxu0 0.0
    %1106 = vmatpush1.msra.mxu0 0.0
    %1107 = vmatprep.subr.mxu0 0.0
    %1108 = vmatpush1.msra.mxu0 0.0
    %1109 = vmatprep.subr.mxu0 0.0
    %1110 = vmatpush1.msra.mxu0 0.0
    %1111 = vmatprep.subr.mxu0 0.0
    %1112 = vmatpush1.msra.mxu0 0.0
    %1113 = vmatprep.subr.mxu0 0.0
    %1114 = vmatpush1.msra.mxu0 %v216
    %1115 = vmatprep.subr.mxu0 0.0
    %1116 = vmatpush1.msra.mxu0 %v215
    %1117 = vmatprep.subr.mxu0 0.0
    %1118 = vmatpush1.msra.mxu0 %v214
    %1119 = vmatprep.subr.mxu0 0.0
    %1120 = vmatpush1.msra.mxu0 %v213
    %1121 = vmatprep.subr.mxu0 0.0
    %1122 = vmatpush1.msra.mxu0 %v212
    %1123 = vmatprep.subr.mxu0 0.0
    %1124 = vmatpush1.msra.mxu0 %v211
    %1125 = vmatprep.subr.mxu0 0.0
    %1126 = vmatpush2.msra.mxu0 0.0
    %1127 = vmatprep.subr.mxu0 0.0
    %1128 = vmatpush2.msra.mxu0 0.0
    %1129 = vmatprep.subr.mxu0 0.0
    %1130 = vmatpush2.msra.mxu0 0.0
    %1131 = vmatprep.subr.mxu0 0.0
    %1132 = vmatpush2.msra.mxu0 0.0
    %1133 = vmatprep.subr.mxu0 0.0
    %1134 = vmatpush2.msra.mxu0 0.0
    %1135 = vmatprep.subr.mxu0 0.0
    %1136 = vmatpush2.msra.mxu0 0.0
    %1137 = vmatprep.subr.mxu0 0.0
    %1138 = vmatpush2.msra.mxu0 0.0
    %1139 = vmatprep.subr.mxu0 0.0
    %1140 = vmatpush2.msra.mxu0 0.0
    %1141 = vmatprep.subr.mxu0 0.0
    %1142 = vmatpush2.msra.mxu0 0.0
    %1143 = vmatprep.subr.mxu0 0.0
    %1144 = vmatpush2.msra.mxu0 0.0
    %1145 = vmatprep.subr.mxu0 0.0
    %1146 = vmatpush2.msra.mxu0 0.0
    %1147 = vmatprep.subr.mxu0 0.0
    %1148 = vmatpush2.msra.mxu0 0.0
    %1149 = vmatprep.subr.mxu0 0.0
    %1150 = vmatpush2.msra.mxu0 0.0
    %1151 = vmatprep.subr.mxu0 0.0
    %1152 = vmatpush2.msra.mxu0 0.0
    %1153 = vmatprep.subr.mxu0 0.0
    %1154 = vmatpush2.msra.mxu0 0.0
    %1155 = vmatprep.subr.mxu0 0.0
    %1156 = vmatpush2.msra.mxu0 0.0
    %1157 = vmatprep.mubr.f32.mxu0 0.0
    %1158 = vmatmul.mubr.f32.gmra.mxu0 %v1091
    %v1159 = vpop.f32.mrf.mxu0
    %v1160 = vadd.f32 %v222, %v1159
    %v1161 = vpop.f32.mrf.mxu0
    %1162 = vdwg.mxu0
    %v1163 = vtanh.pop %v1160
    %v1165 = vsel %vm135, %v1087, 0
    %1167 = vmatprep.subr.mxu0 0.0
    %1168 = vmatpush1.msra.mxu0 0.0
    %1169 = vmatprep.subr.mxu0 0.0
    %1170 = vmatpush1.msra.mxu0 0.0
    %1171 = vmatprep.subr.mxu0 0.0
    %1172 = vmatpush1.msra.mxu0 0.0
    %1173 = vmatprep.subr.mxu0 0.0
    %1174 = vmatpush1.msra.mxu0 0.0
    %1175 = vmatprep.subr.mxu0 0.0
    %1176 = vmatpush1.msra.mxu0 0.0
    %1177 = vmatprep.subr.mxu0 0.0
    %1178 = vmatpush1.msra.mxu0 0.0
    %1179 = vmatprep.subr.mxu0 0.0
    %1180 = vmatpush1.msra.mxu0 0.0
    %1181 = vmatprep.subr.mxu0 0.0
    %1182 = vmatpush1.msra.mxu0 0.0
    %1183 = vmatprep.subr.mxu0 0.0
    %1184 = vmatpush1.msra.mxu0 0.0
    %1185 = vmatprep.subr.mxu0 0.0
    %1186 = vmatpush1.msra.mxu0 0.0
    %1187 = vmatprep.subr.mxu0 0.0
    %1188 = vmatpush1.msra.mxu0 0.0
    %1189 = vmatprep.subr.mxu0 0.0
    %1190 = vmatpush1.msra.mxu0 0.0
    %1191 = vmatprep.subr.mxu0 0.0
    %1192 = vmatpush1.msra.mxu0 %v302
    %1193 = vmatprep.subr.mxu0 0.0
    %1194 = vmatpush1.msra.mxu0 %v301
    %1195 = vmatprep.subr.mxu0 0.0
    %1196 = vmatpush1.msra.mxu0 %v300
    %1197 = vmatprep.subr.mxu0 0.0
    %1198 = vmatpush1.msra.mxu0 %v299
    %1199 = vmatprep.subr.mxu0 0.0
    %1200 = vmatpush2.msra.mxu0 0.0
    %1201 = vmatprep.subr.mxu0 0.0
    %1202 = vmatpush2.msra.mxu0 0.0
    %1203 = vmatprep.subr.mxu0 0.0
    %1204 = vmatpush2.msra.mxu0 0.0
    %1205 = vmatprep.subr.mxu0 0.0
    %1206 = vmatpush2.msra.mxu0 0.0
    %1207 = vmatprep.subr.mxu0 0.0
    %1208 = vmatpush2.msra.mxu0 0.0
    %1209 = vmatprep.subr.mxu0 0.0
    %1210 = vmatpush2.msra.mxu0 0.0
    %1211 = vmatprep.subr.mxu0 0.0
    %1212 = vmatpush2.msra.mxu0 0.0
    %1213 = vmatprep.subr.mxu0 0.0
    %1214 = vmatpush2.msra.mxu0 0.0
    %1215 = vmatprep.subr.mxu0 0.0
    %1216 = vmatpush2.msra.mxu0 0.0
    %1217 = vmatprep.subr.mxu0 0.0
    %1218 = vmatpush2.msra.mxu0 0.0
    %1219 = vmatprep.subr.mxu0 0.0
    %1220 = vmatpush2.msra.mxu0 0.0
    %1221 = vmatprep.subr.mxu0 0.0
    %1222 = vmatpush2.msra.mxu0 0.0
    %1223 = vmatprep.subr.mxu0 0.0
    %1224 = vmatpush2.msra.mxu0 0.0
    %1225 = vmatprep.subr.mxu0 0.0
    %1226 = vmatpush2.msra.mxu0 0.0
    %1227 = vmatprep.subr.mxu0 0.0
    %1228 = vmatpush2.msra.mxu0 0.0
    %1229 = vmatprep.subr.mxu0 0.0
    %1230 = vmatpush2.msra.mxu0 0.0
    %1231 = vmatprep.mubr.f32.mxu0 0.0
    %1232 = vmatmul.mubr.f32.gmra.mxu0 %v1165
    %v1233 = vpop.f32.mrf.mxu0
    %v1234 = vadd.f32 %v308, %v1233
    %v1235 = vpop.f32.mrf.mxu0
    %1236 = vdwg.mxu0
    %v1237 = vsel %vm383, %v1234, 0.0
    %1238 = vadd.xlane.f32.xlu0 %v1237
    %v1239 = vpop.xlane.xlu0 %1238
    %v1240 = vmul.f32 %v1239, %v387
    %v1241 = vsub.f32 %v1234, %v1240
    %v1242 = vmul.f32 %v1241, %v1241
    %v1243 = vsel %vm383, %v1242, 0.0
    %1244 = vadd.xlane.f32.xlu0 %v1243
    %v1245 = vpop.xlane.xlu0 %1244
    %v1246 = vmul.f32 %v1245, %v387
    %v1247 = vadd.f32 %v1246, 1e-05
    %v1248 = vrsqrt.pop %v1247
    %v1249 = vmul.f32 %v1241, %v1248
    %v1250 = vmul.f32 %v1249, %v402
    %v1251 = vadd.f32 %v1250, %v409
    %v1252 = vsel %vm383, %v1163, 0.0
    %1253 = vadd.xlane.f32.xlu0 %v1252
    %v1254 = vpop.xlane.xlu0 %1253
    %v1255 = vmul.f32 %v1254, %v387
    %v1256 = vsub.f32 %v1163, %v1255
    %v1257 = vmul.f32 %v1256, %v1256
    %v1258 = vsel %vm383, %v1257, 0.0
    %1259 = vadd.xlane.f32.xlu0 %v1258
    %v1260 = vpop.xlane.xlu0 %1259
    %v1261 = vmul.f32 %v1260, %v387
    %v1262 = vadd.f32 %v1261, 1e-05
    %v1263 = vrsqrt.pop %v1262
    %v1264 = vmul.f32 %v1256, %v1263
    %v1265 = vmul.f32 %v1264, %v402
    %v1266 = vadd.f32 %v1265, %v409
    %v1267 = vmul.f32 %v1251, %v432
    %v1268 = vsel %vm383, %v1267, 0.0
    %1269 = vadd.xlane.f32.xlu0 %v1268
    %v1270 = vpop.xlane.xlu0 %1269
    %v1271 = vmul.f32 %v1266, %v443
    %v1272 = vsel %vm383, %v1271, 0.0
    %1273 = vadd.xlane.f32.xlu0 %v1272
    %v1274 = vpop.xlane.xlu0 %1273
    %v1275 = vadd.f32 %v1270, %v1274
    %v1276 = vadd.f32 %v1275, %v455
    %vm1277 = vcmp.eq.s32.totalorder %v122, 3
    %1279 = vset.pattern.permute.xlu0 0
    %1280 = vperm.xlu0 %1279, %v1276
    %v1281 = vpop.permute.xlu0 %1280
    %v1283 = vsel %vm1277, %v1281, 0.0
    %v1284 = vadd.f32 %v1011, %v1283
    %vm1285 = vcmask 25600
    %1286 = vst.msk [vmem:[#allocation12] sm:$0x3] %vm1285, %v1284
    %v1287 = vsel %vm1285, %v1284, -inf
    %1288 = vmax.xlane.f32.xlu0 %v1287
    %v1289 = vpop.xlane.xlu0 %1288
    %v1290 = vsub.f32 %v1284, %v1289
    %v1291 = vmul.f32 %v1290, 1.442695
    %v1292 = vpow.pop %v1291
    %v1293 = vsel %vm1285, %v1292, 0.0
    %1294 = vadd.xlane.f32.xlu0 %v1293
    %v1295 = vpop.xlane.xlu0 %1294
    %v1296 = vrcp.pop %v1295
    %v1297 = vmul.f32 %v1295, %v1296
    %v1298 = vsub.f32 2.0, %v1297
    %v1299 = vmul.f32 %v1296, %v1298
    %v1300 = vmul.f32 %v1292, %v1299
    %1301 = vst.msk [vmem:[#allocation13] sm:$0x3] %vm1285, %v1300
    %vm1302 = vcmp.eq.f32.partialorder %v1284, %v1289
    %v1303 = vsel %vm1302, %v122, 4
    %v1304 = vsel %vm1285, %v1303, 2147483647
    %v1305 = vand.u32 %v1304, 65535
    %v1306 = vshra.s32 %v1304, 16
    %v1307 = vcvt.s32.f32 %v1305
    %v1308 = vcvt.s32.f32 %v1306
    %1309 = vmin.xlane.f32.xlu0 %v1308
    %v1310 = vpop.xlane.xlu0 %1309
    %vm1311 = vcmp.eq.f32.partialorder %v1308, %v1310
    %v1312 = vsel %vm1311, %v1307, inf
    %1313 = vmin.xlane.f32.xlu0 %v1312
    %v1314 = vpop.xlane.xlu0 %1313
    %v1315 = vcvt.f32.s32 %v1314
    %v1316 = vcvt.f32.s32 %v1310
    %v1317 = vshll.u32 %v1316, 16
    %v1318 = vadd.s32 %v1317, %v1315
    %vm1319 = vcmask 1024
    %1320 = vst.msk [vmem:[%s15] sm:$0x3] %vm1319, %v1318
    // Predicated region
    $region74: #{tpu_custom_call.1} parent=1 // pred_check
      _
    $region75: #{tpu_custom_call.1} parent=1 // pred_check_branch
      %1322 = sbr.rel (0) target = $region77
    $region76: #{tpu_custom_call.1} parent=1 // pred_region
      %s1324 = ssub.s32 32, 32
      %1325 = vsyncadd [#allocation5], %s1324
      %s1327 = sshll.u32 [#allocation12], 4
      %s1328 = int_to_ptr.vmem [resolvable:$true] %s1327
      %1330 = dma.vmem_to_hbm [thread:$0]  %s1328, 32, %s13, [#allocation5]
    $region77: #{tpu_custom_call.1} parent=1 // pred_fallthru
      _
    // Predicated region
    $region78: #{tpu_custom_call.1} parent=1 // pred_check
      _
    $region79: #{tpu_custom_call.1} parent=1 // pred_check_branch
      %1332 = sbr.rel (0) target = $region81
    $region80: #{tpu_custom_call.1} parent=1 // pred_region
      %s1334 = ssub.s32 32, 32
      %1335 = vsyncadd [#allocation14], %s1334
      %s1337 = sshll.u32 [#allocation13], 4
      %s1338 = int_to_ptr.vmem [resolvable:$true] %s1337
      %1340 = dma.vmem_to_hbm [thread:$0]  %s1338, 32, %s14, [#allocation14]
    $region81: #{tpu_custom_call.1} parent=1 // pred_fallthru
      _
    // Predicated region
    $region82: #{tpu_custom_call.1} parent=1 // pred_check
      _
    $region83: #{tpu_custom_call.1} parent=1 // pred_check_branch
      %1342 = sbr.rel (0) target = $region85
    $region84: #{tpu_custom_call.1} parent=1 // pred_region
      _
    $region85: #{tpu_custom_call.1} parent=1 // pred_fallthru
      _
    // Predicated region
    $region86: #{tpu_custom_call.1} parent=1 // pred_check
      _
    $region87: #{tpu_custom_call.1} parent=1 // pred_check_branch
      %1344 = sbr.rel (0) target = $region89
    $region88: #{tpu_custom_call.1} parent=1 // pred_region
      %1345 = dma.done [#allocation5], 32
    $region89: #{tpu_custom_call.1} parent=1 // pred_fallthru
      _
    // Predicated region
    $region90: #{tpu_custom_call.1} parent=1 // pred_check
      _
    $region91: #{tpu_custom_call.1} parent=1 // pred_check_branch
      %1347 = sbr.rel (0) target = $region93
    $region92: #{tpu_custom_call.1} parent=1 // pred_region
      %1348 = dma.done [#allocation14], 32
    $region93: #{tpu_custom_call.1} parent=1 // pred_fallthru
      _
    // Predicated region
    $region94: #{tpu_custom_call.1} parent=1 // pred_check
      _
    $region95: #{tpu_custom_call.1} parent=1 // pred_check_branch
      %1350 = sbr.rel (0) target = $region97
    $region96: #{tpu_custom_call.1} parent=1 // pred_region
      _
    $region97: #{tpu_custom_call.1} parent=1 // pred_fallthru
      _
    %1351 = vsyncpa [#allocation4], 1
    %1352 = vsyncpa [#allocation7], 1
    %1353 = vsyncpa [#allocation10], 1
    %1354 = vsyncpa [#allocation5], 1
    %1355 = vsyncpa [#allocation14], 1

</llo_original>
